<compile_context>
chip_gen: v7x
topology: tpu7x:2x2x1
jax: 0.10.0
libtpu: 0.0.40
codegen_flags: <defaults>
</compile_context>

<pallas_src>
import functools
import math

import jax
import jax.numpy as jnp
from jax.experimental import pallas as pl
from jax.experimental.pallas import tpu as pltpu


def _gated_dvn_kernel(q_ref, v_ref, w1_ref, w2_ref, gw_ref, mcv_ref, b_ref,
                      out_ref, *, depth: int, use_layernorm: bool,
                      activation2_name: str, feat: int, bf16_eup: bool):
    F = feat
    f32, bf16 = jnp.float32, jnp.bfloat16
    tdt = bf16 if bf16_eup else f32   # transcendental (EUP) compute dtype

    def bias(j):
        # (F, 1) column, re-read from VMEM at point of use (vld is cheap) and
        # implicitly lane-broadcast by the add -- avoids pinning (F, R) f32
        # broadcasts in vregs across the whole unrolled depth loop.
        return b_ref[:, j:j + 1]

    def sig(x):
        return jax.nn.sigmoid(x.astype(tdt)).astype(f32)

    def tanh(x):
        return jnp.tanh(x.astype(tdt)).astype(f32)

    def act2(x):
        if activation2_name == "tanhshrink":
            return x - tanh(x)     # keep the cancellation-prone subtract in f32
        return tanh(x)

    # State in transposed layout: (F, ROWS), ROWS = Bt*N (lane-dense).
    v = v_ref[0]

    for _ in range(depth):          # depth is small & static -> unrolled
        v_bf = v.astype(bf16)

        # (Q @ V)^T for all Bt batches at once via the block-diagonal Q^T:
        # (F, R) @ (R, R) -> (F, R), f32 MXU accumulation.
        qv = jnp.dot(v_bf, q_ref[0], preferred_element_type=f32)

        # out  = relu(M1(QV))        (transposed: W1 @ qv^T + b1)
        h = jnp.maximum(
            jnp.dot(w1_ref[...], qv.astype(bf16), preferred_element_type=f32)
            + bias(0), 0.0)
        # W_dvn = act2(M2(out))
        w = act2(jnp.dot(w2_ref[...], h.astype(bf16), preferred_element_type=f32)
                 + bias(1))
        w_bf = w.astype(bf16)

        # Fused gating projection: a single (3F, 2F) @ (2F, R) matmul computes
        #   [Mr ; Mu ; (0 | Mc_w-half)] @ [v ; w]   -> (3F, R)
        x_cat = jnp.concatenate([v_bf, w_bf], axis=0)
        g = jnp.dot(gw_ref[...], x_cat, preferred_element_type=f32)
        gc = g[2 * F:].astype(bf16)   # Mc w-part: shorten its f32 live range

        r = sig(g[:F] + bias(2))
        u = sig(g[F:2 * F] + bias(3))

        c = tanh(jnp.dot(mcv_ref[...], (r * v).astype(bf16),
                         preferred_element_type=f32) + gc + bias(4))

        # u*v + (1-u)*c  ==  c + u*(v-c)
        v_res = c + u * (v - c)
        if use_layernorm:
            # Feature axis is axis 0 in the transposed layout; one-pass var.
            mean = jnp.mean(v_res, axis=0, keepdims=True)
            ex2 = jnp.mean(v_res * v_res, axis=0, keepdims=True)
            inv = jax.lax.rsqrt(ex2 - mean * mean + 1e-5)
            v_res = (v_res - mean) * inv * bias(5) + bias(6)
        v = tanh(v_res)

    out_ref[0] = v.astype(out_ref.dtype)


def _pick_block_batch(B, N, device_kind="", block_batch=None):
    """Batches packed per grid step.  Rows/step = Bt*N: aim for a multiple of
    128 (lane-dense tiles / unmasked vst), ~128 rows by default, 256 on v6e
    (fills its 256-wide MXU and halves the serial per-depth matmul chains),
    and keep >= 2 grid steps on v7x so both TensorCores get work."""
    if block_batch is not None:
        return max(1, int(block_batch))
    kind = (device_kind or "").lower()
    target_rows = 256 if "v6" in kind else 128
    n = max(int(N), 1)
    step = 128 // math.gcd(n, 128)          # smallest Bt with Bt*N % 128 == 0
    if step * n > 2 * target_rows or step > 2 * max(int(B), 1):
        # Lane-dense rows would need excessive padding: fall back (correct,
        # just lane-sparse).  TODO(synk): pad N per batch for awkward N.
        return max(1, min(int(B), target_rows // n) or 1)
    Bt = step * max(1, target_rows // (step * n))
    Bt = min(Bt, step * (-(-int(B) // step)))   # don't over-pad tiny batches
    if "v7" in kind:
        while Bt > step and -(-int(B) // Bt) < 2:
            Bt -= step
    return Bt


def gated_dvn_pallas(Q, V, params, *, depth=3, use_layernorm=False,
                     activation2_name="tanh", block_batch=None,
                     bf16_transcendentals=None):
    """Q: (B, N, N), V: (B, N, F).  params: dict from pack_params().

    Call this under jax.jit.  If Q is reused across calls, the block-diagonal
    packing below can be hoisted by the caller.
    """
    a2 = activation2_name.lower()
    if a2 not in ("tanh", "tanhshrink"):
        raise ValueError(f"unsupported activation2_name: {activation2_name!r}")
    # TODO(synk): activation1 is an arbitrary callable in the PyTorch module;
    # the kernel implements the default (relu).

    B, N, _ = Q.shape
    F = V.shape[-1]
    if F % 8:
        raise ValueError("n_features must be a multiple of 8 (sublane tiling)")

    try:
        kind = jax.devices()[0].device_kind
    except Exception:  # pragma: no cover - defensive
        kind = ""
    if bf16_transcendentals is None:
        # bf16 EUP/VPU paths exist on v6e / v7x only; keep f32 on v5e & older.
        bf16_transcendentals = ("v6" in kind.lower()) or ("v7" in kind.lower())

    Bt = _pick_block_batch(B, N, kind, block_batch)
    G = -(-B // Bt)
    B_pad = G * Bt
    ROWS = Bt * N
    if B_pad != B:  # pad with dummy batches instead of shrinking the block
        Q = jnp.concatenate([Q, jnp.zeros((B_pad - B, N, N), Q.dtype)], axis=0)
        V = jnp.concatenate([V, jnp.zeros((B_pad - B, N, F), V.dtype)], axis=0)

    # Block-diagonal transposed Q per group: block (i,i) = Q_i^T, so that
    # (V^T @ Q_bd^T) computes all Bt per-batch (Q @ V)^T in one matmul.
    qg = Q.reshape(G, Bt, N, N)
    eye = jnp.eye(Bt, dtype=Q.dtype)
    q_bd_t = jnp.einsum("ij,giba->giajb", eye, qg).reshape(G, ROWS, ROWS)
    q_bd_t = q_bd_t.astype(jnp.bfloat16)

    # V -> (G, F, ROWS) feature-major (lane-dense activations in the kernel).
    v_t = jnp.swapaxes(V.reshape(G, ROWS, F), 1, 2).astype(jnp.float32)

    kernel = functools.partial(
        _gated_dvn_kernel, depth=depth, use_layernorm=use_layernorm,
        activation2_name=a2, feat=F, bf16_eup=bool(bf16_transcendentals))

    def const(shape):   # grid-invariant weight / bias blocks
        return pl.BlockSpec(shape, lambda g: (0, 0))

    # NOTE(v7x): total VMEM here is <1 MiB; if N/F are ever scaled up,
    # single-buffer the const specs (pipeline_mode=pl.Buffered(1)) and cap
    # vmem_limit_bytes via CompilerParams.
    fn = pl.pallas_call(
        kernel,
        out_shape=jax.ShapeDtypeStruct((G, F, ROWS), jnp.float32),
        grid=(G,),
        in_specs=[
            pl.BlockSpec((1, ROWS, ROWS), lambda g: (g, 0, 0)),  # block-diag Q^T
            pl.BlockSpec((1, F, ROWS), lambda g: (g, 0, 0)),     # V^T
            const((F, F)),            # M1 weight
            const((F, F)),            # M2 weight
            const((3 * F, 2 * F)),    # fused [Mr; Mu; (0|Mc_w-half)] weight
            const((F, F)),            # Mc v-half weight
            const((F, 8)),            # packed biases + LayerNorm params
        ],
        out_specs=pl.BlockSpec((1, F, ROWS), lambda g: (g, 0, 0)),
        compiler_params=pltpu.CompilerParams(
            dimension_semantics=("parallel",)),
    )
    p = params
    out_t = fn(q_bd_t, v_t, p["w1"], p["w2"], p["g_fused"], p["mc_v"],
               p["biases"])

    # (G, F, ROWS) -> (B, N, F); under jit the transpose fuses with the copy.
    out = jnp.swapaxes(out_t, 1, 2).reshape(B_pad, N, F)
    return out[:B]


def init_params(key, n_features):
    """Xavier-uniform init matching the PyTorch module, PyTorch (out,in) layout."""
    F = n_features

    def xavier(k, shape):
        fan_out, fan_in = shape
        bound = math.sqrt(6.0 / (fan_in + fan_out))
        return jax.random.uniform(k, shape, jnp.float32, -bound, bound)

    k1, k2, kr, ku, kc = jax.random.split(key, 5)
    z = jnp.zeros((F,), jnp.float32)
    return {
        "M1_w": xavier(k1, (F, F)), "M1_b": z,
        "M2_w": xavier(k2, (F, F)), "M2_b": z,
        "Mr_w": xavier(kr, (F, 2 * F)), "Mr_b": z,
        "Mu_w": xavier(ku, (F, 2 * F)), "Mu_b": z,
        "Mc_w": xavier(kc, (F, 2 * F)), "Mc_b": z,
        "ln_w": jnp.ones((F,), jnp.float32),
        "ln_b": jnp.zeros((F,), jnp.float32),
    }


def pack_params(tp):
    """PyTorch-layout params -> fused / packed / bf16 kernel params."""
    F = tp["M1_w"].shape[0]
    bf16 = jnp.bfloat16
    # Fused gating weight (3F, 2F): rows = [Mr ; Mu ; (0 | Mc w-half)].
    g_fused = jnp.concatenate([
        tp["Mr_w"],
        tp["Mu_w"],
        jnp.concatenate([jnp.zeros((F, F), jnp.float32), tp["Mc_w"][:, F:]],
                        axis=1),
    ], axis=0).astype(bf16)
    # All per-feature vectors packed into one (F, 8) f32 block:
    # columns = [M1_b, M2_b, Mr_b, Mu_b, Mc_b, ln_w, ln_b, 0].
    biases = jnp.stack(
        [tp["M1_b"], tp["M2_b"], tp["Mr_b"], tp["Mu_b"], tp["Mc_b"],
         tp["ln_w"], tp["ln_b"], jnp.zeros_like(tp["M1_b"])],
        axis=1).astype(jnp.float32)
    return {
        "w1": tp["M1_w"].astype(bf16),        # (F, F) = (out, in)
        "w2": tp["M2_w"].astype(bf16),
        "g_fused": g_fused,                   # (3F, 2F)
        "mc_v": tp["Mc_w"][:, :F].astype(bf16),
        "biases": biases,                     # (F, 8)
    }


def gated_dvn_ref(Q, V, tp, *, depth=3, use_layernorm=False,
                  activation2_name="tanh"):
    """Pure-JAX f32 reference of the PyTorch forward (for checking)."""
    HI = jax.lax.Precision.HIGHEST

    def lin(x, w, b):
        return jnp.einsum("...i,oi->...o", x, w, precision=HI) + b

    act2 = ((lambda x: x - jnp.tanh(x))
            if activation2_name.lower() == "tanhshrink" else jnp.tanh)
    v = V
    for _ in range(depth):
        qv = jnp.einsum("bij,bjf->bif", Q, v, precision=HI)
        h = jax.nn.relu(lin(qv, tp["M1_w"], tp["M1_b"]))
        w = act2(lin(h, tp["M2_w"], tp["M2_b"]))
        cat = jnp.concatenate([v, w], axis=-1)
        r = jax.nn.sigmoid(lin(cat, tp["Mr_w"], tp["Mr_b"]))
        u = jax.nn.sigmoid(lin(cat, tp["Mu_w"], tp["Mu_b"]))
        c = jnp.tanh(lin(jnp.concatenate([r * v, w], axis=-1),
                         tp["Mc_w"], tp["Mc_b"]))
        v_res = u * v + (1.0 - u) * c
        if use_layernorm:
            mean = jnp.mean(v_res, axis=-1, keepdims=True)
            var = jnp.mean((v_res - mean) ** 2, axis=-1, keepdims=True)
            v_res = (v_res - mean) * jax.lax.rsqrt(var + 1e-5) * tp["ln_w"] + tp["ln_b"]
        v = jnp.tanh(v_res)
    return v


if __name__ == "__main__":
    B, N, F = 16, 16, 32   # Bt*N lands on 128 (or 256 on v6e) rows per step
    DEPTH = 3

    key = jax.random.PRNGKey(0)
    kq, kp = jax.random.split(key)

    # Q: scaled & masked matrix (synthetic), V: all ones (typical).
    Q = 0.1 * jax.random.normal(kq, (B, N, N), jnp.float32)
    V = jnp.ones((B, N, F), jnp.float32)

    torch_params = init_params(kp, F)
    kernel_params = pack_params(torch_params)

    fwd = jax.jit(functools.partial(
        gated_dvn_pallas, depth=DEPTH, use_layernorm=False,
        activation2_name="tanh"))
    out = jax.block_until_ready(fwd(Q, V, kernel_params))
    assert out.shape == (B, N, F)
    ref = gated_dvn_ref(Q, V, torch_params, depth=DEPTH, use_layernorm=False)
    err = float(jnp.max(jnp.abs(out - ref)))
    # bf16 MXU operands (and bf16 EUP on v6e/v7x) vs f32/HIGHEST reference.
    assert err < 5e-2, f"mismatch vs JAX reference: max |diff| = {err}"

    # Exercise the LayerNorm path too (previously untested).  bf16 error is
    # amplified by the 1/std normalization -> slightly looser bound.
    fwd_ln = jax.jit(functools.partial(
        gated_dvn_pallas, depth=DEPTH, use_layernorm=True,
        activation2_name="tanh"))
    out_ln = jax.block_until_ready(fwd_ln(Q, V, kernel_params))
    ref_ln = gated_dvn_ref(Q, V, torch_params, depth=DEPTH, use_layernorm=True)
    err_ln = float(jnp.max(jnp.abs(out_ln - ref_ln)))
    assert err_ln < 7.5e-2, f"LayerNorm path mismatch: max |diff| = {err_ln}"

    print("KERNEL_OK")
</pallas_src>

<mosaic_0001>
module attributes {stable_mosaic.version = 11 : i64} {
  func.func @_gated_dvn_kernel(%arg0: i32, %arg1: memref<1x128x128xbf16, #tpu.memory_space<vmem>>, %arg2: memref<1x32x128xf32, #tpu.memory_space<vmem>>, %arg3: memref<32x32xbf16, #tpu.memory_space<vmem>>, %arg4: memref<32x32xbf16, #tpu.memory_space<vmem>>, %arg5: memref<96x64xbf16, #tpu.memory_space<vmem>>, %arg6: memref<32x32xbf16, #tpu.memory_space<vmem>>, %arg7: memref<32x8xf32, #tpu.memory_space<vmem>>, %arg8: memref<1x32x128xf32, #tpu.memory_space<vmem>>) attributes {dimension_semantics = [#tpu.dimension_semantics<parallel>], iteration_bounds = array<i64: 2>, scalar_prefetch = 0 : i64, scratch_operands = 0 : i64, tpu.core_type = #tpu.core_type<tc>, window_params = [{transform_indices = @transform_0, window_bounds = array<i64: 1, 128, 128>}, {transform_indices = @transform_1, window_bounds = array<i64: 1, 32, 128>}, {pipeline_mode = #tpu.pipeline_mode<synchronous>, transform_indices = @transform_2, window_bounds = array<i64: 32, 32>}, {pipeline_mode = #tpu.pipeline_mode<synchronous>, transform_indices = @transform_3, window_bounds = array<i64: 32, 32>}, {pipeline_mode = #tpu.pipeline_mode<synchronous>, transform_indices = @transform_4, window_bounds = array<i64: 96, 64>}, {pipeline_mode = #tpu.pipeline_mode<synchronous>, transform_indices = @transform_5, window_bounds = array<i64: 32, 32>}, {pipeline_mode = #tpu.pipeline_mode<synchronous>, transform_indices = @transform_6, window_bounds = array<i64: 32, 8>}, {transform_indices = @transform_7, window_bounds = array<i64: 1, 32, 128>}]} {
    %c0 = arith.constant 0 : index
    %c0_0 = arith.constant 0 : index
    %c0_1 = arith.constant 0 : index
    %0 = vector.load %arg2[%c0, %c0_0, %c0_1] : memref<1x32x128xf32, #tpu.memory_space<vmem>>, vector<1x32x128xf32>
    %1 = vector.shape_cast %0 : vector<1x32x128xf32> to vector<32x128xf32>
    %2 = arith.truncf %1 : vector<32x128xf32> to vector<32x128xbf16>
    %c0_2 = arith.constant 0 : index
    %c0_3 = arith.constant 0 : index
    %c0_4 = arith.constant 0 : index
    %3 = vector.load %arg1[%c0_2, %c0_3, %c0_4] : memref<1x128x128xbf16, #tpu.memory_space<vmem>>, vector<1x128x128xbf16>
    %4 = vector.shape_cast %3 : vector<1x128x128xbf16> to vector<128x128xbf16>
    %cst = arith.constant dense<0.000000e+00> : vector<32x128xf32>
    %5 = tpu.matmul %2, %4, %cst {dimension_numbers = #tpu.dot_dimension_numbers<[1], [0], [0], [1], [0, 0, 1, 1], [], []>} : vector<32x128xbf16>, vector<128x128xbf16>, vector<32x128xf32> -> vector<32x128xf32>
    %c0_5 = arith.constant 0 : index
    %c0_6 = arith.constant 0 : index
    %6 = vector.load %arg3[%c0_5, %c0_6] : memref<32x32xbf16, #tpu.memory_space<vmem>>, vector<32x32xbf16>
    %7 = arith.truncf %5 : vector<32x128xf32> to vector<32x128xbf16>
    %cst_7 = arith.constant dense<0.000000e+00> : vector<32x128xf32>
    %8 = tpu.matmul %6, %7, %cst_7 {dimension_numbers = #tpu.dot_dimension_numbers<[1], [0], [0], [1], [0, 0, 1, 1], [], []>} : vector<32x32xbf16>, vector<32x128xbf16>, vector<32x128xf32> -> vector<32x128xf32>
    %c0_8 = arith.constant 0 : index
    %c0_9 = arith.constant 0 : index
    %9 = vector.load %arg7[%c0_8, %c0_9] : memref<32x8xf32, #tpu.memory_space<vmem>>, vector<32x1xf32>
    %10 = vector.broadcast %9 : vector<32x1xf32> to vector<32x128xf32>
    %11 = arith.addf %8, %10 : vector<32x128xf32>
    %cst_10 = arith.constant 0.000000e+00 : f32
    %12 = vector.broadcast %cst_10 : f32 to vector<32x128xf32>
    %13 = arith.maximumf %11, %12 : vector<32x128xf32>
    %c0_11 = arith.constant 0 : index
    %c0_12 = arith.constant 0 : index
    %14 = vector.load %arg4[%c0_11, %c0_12] : memref<32x32xbf16, #tpu.memory_space<vmem>>, vector<32x32xbf16>
    %15 = arith.truncf %13 : vector<32x128xf32> to vector<32x128xbf16>
    %cst_13 = arith.constant dense<0.000000e+00> : vector<32x128xf32>
    %16 = tpu.matmul %14, %15, %cst_13 {dimension_numbers = #tpu.dot_dimension_numbers<[1], [0], [0], [1], [0, 0, 1, 1], [], []>} : vector<32x32xbf16>, vector<32x128xbf16>, vector<32x128xf32> -> vector<32x128xf32>
    %c0_14 = arith.constant 0 : index
    %c1 = arith.constant 1 : index
    %17 = vector.load %arg7[%c0_14, %c1] : memref<32x8xf32, #tpu.memory_space<vmem>>, vector<32x1xf32>
    %18 = vector.broadcast %17 : vector<32x1xf32> to vector<32x128xf32>
    %19 = arith.addf %16, %18 : vector<32x128xf32>
    %20 = math.tanh %19 : vector<32x128xf32>
    %21 = arith.truncf %20 : vector<32x128xf32> to vector<32x128xbf16>
    %22 = tpu.concatenate %2, %21 in 0 : vector<32x128xbf16>, vector<32x128xbf16> -> vector<64x128xbf16>
    %c0_15 = arith.constant 0 : index
    %c0_16 = arith.constant 0 : index
    %23 = vector.load %arg5[%c0_15, %c0_16] : memref<96x64xbf16, #tpu.memory_space<vmem>>, vector<96x64xbf16>
    %cst_17 = arith.constant dense<0.000000e+00> : vector<96x128xf32>
    %24 = tpu.matmul %23, %22, %cst_17 {dimension_numbers = #tpu.dot_dimension_numbers<[1], [0], [0], [1], [0, 0, 1, 1], [], []>} : vector<96x64xbf16>, vector<64x128xbf16>, vector<96x128xf32> -> vector<96x128xf32>
    %25 = vector.extract_strided_slice %24 {offsets = [64, 0], sizes = [32, 128], strides = [1, 1]} : vector<96x128xf32> to vector<32x128xf32>
    %26 = arith.truncf %25 : vector<32x128xf32> to vector<32x128xbf16>
    %27 = vector.extract_strided_slice %24 {offsets = [0, 0], sizes = [32, 128], strides = [1, 1]} : vector<96x128xf32> to vector<32x128xf32>
    %c0_18 = arith.constant 0 : index
    %c2 = arith.constant 2 : index
    %28 = vector.load %arg7[%c0_18, %c2] : memref<32x8xf32, #tpu.memory_space<vmem>>, vector<32x1xf32>
    %29 = vector.broadcast %28 : vector<32x1xf32> to vector<32x128xf32>
    %30 = arith.addf %27, %29 : vector<32x128xf32>
    %31 = arith.negf %30 : vector<32x128xf32>
    %32 = math.exp %31 : vector<32x128xf32>
    %cst_19 = arith.constant 1.000000e+00 : f32
    %33 = vector.broadcast %cst_19 : f32 to vector<32x128xf32>
    %34 = arith.addf %33, %32 : vector<32x128xf32>
    %35 = arith.divf %33, %34 : vector<32x128xf32>
    %36 = vector.extract_strided_slice %24 {offsets = [32, 0], sizes = [32, 128], strides = [1, 1]} : vector<96x128xf32> to vector<32x128xf32>
    %c0_20 = arith.constant 0 : index
    %c3 = arith.constant 3 : index
    %37 = vector.load %arg7[%c0_20, %c3] : memref<32x8xf32, #tpu.memory_space<vmem>>, vector<32x1xf32>
    %38 = vector.broadcast %37 : vector<32x1xf32> to vector<32x128xf32>
    %39 = arith.addf %36, %38 : vector<32x128xf32>
    %40 = arith.negf %39 : vector<32x128xf32>
    %41 = math.exp %40 : vector<32x128xf32>
    %cst_21 = arith.constant 1.000000e+00 : f32
    %42 = vector.broadcast %cst_21 : f32 to vector<32x128xf32>
    %43 = arith.addf %42, %41 : vector<32x128xf32>
    %44 = arith.divf %42, %43 : vector<32x128xf32>
    %c0_22 = arith.constant 0 : index
    %c0_23 = arith.constant 0 : index
    %45 = vector.load %arg6[%c0_22, %c0_23] : memref<32x32xbf16, #tpu.memory_space<vmem>>, vector<32x32xbf16>
    %46 = arith.mulf %35, %1 : vector<32x128xf32>
    %47 = arith.truncf %46 : vector<32x128xf32> to vector<32x128xbf16>
    %cst_24 = arith.constant dense<0.000000e+00> : vector<32x128xf32>
    %48 = tpu.matmul %45, %47, %cst_24 {dimension_numbers = #tpu.dot_dimension_numbers<[1], [0], [0], [1], [0, 0, 1, 1], [], []>} : vector<32x32xbf16>, vector<32x128xbf16>, vector<32x128xf32> -> vector<32x128xf32>
    %49 = arith.extf %26 : vector<32x128xbf16> to vector<32x128xf32>
    %50 = arith.addf %48, %49 : vector<32x128xf32>
    %c0_25 = arith.constant 0 : index
    %c4 = arith.constant 4 : index
    %51 = vector.load %arg7[%c0_25, %c4] : memref<32x8xf32, #tpu.memory_space<vmem>>, vector<32x1xf32>
    %52 = vector.broadcast %51 : vector<32x1xf32> to vector<32x128xf32>
    %53 = arith.addf %50, %52 : vector<32x128xf32>
    %54 = math.tanh %53 : vector<32x128xf32>
    %55 = arith.subf %1, %54 : vector<32x128xf32>
    %56 = arith.mulf %44, %55 : vector<32x128xf32>
    %57 = arith.addf %54, %56 : vector<32x128xf32>
    %58 = math.tanh %57 : vector<32x128xf32>
    %59 = arith.truncf %58 : vector<32x128xf32> to vector<32x128xbf16>
    %c0_26 = arith.constant 0 : index
    %c0_27 = arith.constant 0 : index
    %c0_28 = arith.constant 0 : index
    %60 = vector.load %arg1[%c0_26, %c0_27, %c0_28] : memref<1x128x128xbf16, #tpu.memory_space<vmem>>, vector<1x128x128xbf16>
    %61 = vector.shape_cast %60 : vector<1x128x128xbf16> to vector<128x128xbf16>
    %cst_29 = arith.constant dense<0.000000e+00> : vector<32x128xf32>
    %62 = tpu.matmul %59, %61, %cst_29 {dimension_numbers = #tpu.dot_dimension_numbers<[1], [0], [0], [1], [0, 0, 1, 1], [], []>} : vector<32x128xbf16>, vector<128x128xbf16>, vector<32x128xf32> -> vector<32x128xf32>
    %c0_30 = arith.constant 0 : index
    %c0_31 = arith.constant 0 : index
    %63 = vector.load %arg3[%c0_30, %c0_31] : memref<32x32xbf16, #tpu.memory_space<vmem>>, vector<32x32xbf16>
    %64 = arith.truncf %62 : vector<32x128xf32> to vector<32x128xbf16>
    %cst_32 = arith.constant dense<0.000000e+00> : vector<32x128xf32>
    %65 = tpu.matmul %63, %64, %cst_32 {dimension_numbers = #tpu.dot_dimension_numbers<[1], [0], [0], [1], [0, 0, 1, 1], [], []>} : vector<32x32xbf16>, vector<32x128xbf16>, vector<32x128xf32> -> vector<32x128xf32>
    %c0_33 = arith.constant 0 : index
    %c0_34 = arith.constant 0 : index
    %66 = vector.load %arg7[%c0_33, %c0_34] : memref<32x8xf32, #tpu.memory_space<vmem>>, vector<32x1xf32>
    %67 = vector.broadcast %66 : vector<32x1xf32> to vector<32x128xf32>
    %68 = arith.addf %65, %67 : vector<32x128xf32>
    %cst_35 = arith.constant 0.000000e+00 : f32
    %69 = vector.broadcast %cst_35 : f32 to vector<32x128xf32>
    %70 = arith.maximumf %68, %69 : vector<32x128xf32>
    %c0_36 = arith.constant 0 : index
    %c0_37 = arith.constant 0 : index
    %71 = vector.load %arg4[%c0_36, %c0_37] : memref<32x32xbf16, #tpu.memory_space<vmem>>, vector<32x32xbf16>
    %72 = arith.truncf %70 : vector<32x128xf32> to vector<32x128xbf16>
    %cst_38 = arith.constant dense<0.000000e+00> : vector<32x128xf32>
    %73 = tpu.matmul %71, %72, %cst_38 {dimension_numbers = #tpu.dot_dimension_numbers<[1], [0], [0], [1], [0, 0, 1, 1], [], []>} : vector<32x32xbf16>, vector<32x128xbf16>, vector<32x128xf32> -> vector<32x128xf32>
    %c0_39 = arith.constant 0 : index
    %c1_40 = arith.constant 1 : index
    %74 = vector.load %arg7[%c0_39, %c1_40] : memref<32x8xf32, #tpu.memory_space<vmem>>, vector<32x1xf32>
    %75 = vector.broadcast %74 : vector<32x1xf32> to vector<32x128xf32>
    %76 = arith.addf %73, %75 : vector<32x128xf32>
    %77 = math.tanh %76 : vector<32x128xf32>
    %78 = arith.truncf %77 : vector<32x128xf32> to vector<32x128xbf16>
    %79 = tpu.concatenate %59, %78 in 0 : vector<32x128xbf16>, vector<32x128xbf16> -> vector<64x128xbf16>
    %c0_41 = arith.constant 0 : index
    %c0_42 = arith.constant 0 : index
    %80 = vector.load %arg5[%c0_41, %c0_42] : memref<96x64xbf16, #tpu.memory_space<vmem>>, vector<96x64xbf16>
    %cst_43 = arith.constant dense<0.000000e+00> : vector<96x128xf32>
    %81 = tpu.matmul %80, %79, %cst_43 {dimension_numbers = #tpu.dot_dimension_numbers<[1], [0], [0], [1], [0, 0, 1, 1], [], []>} : vector<96x64xbf16>, vector<64x128xbf16>, vector<96x128xf32> -> vector<96x128xf32>
    %82 = vector.extract_strided_slice %81 {offsets = [64, 0], sizes = [32, 128], strides = [1, 1]} : vector<96x128xf32> to vector<32x128xf32>
    %83 = arith.truncf %82 : vector<32x128xf32> to vector<32x128xbf16>
    %84 = vector.extract_strided_slice %81 {offsets = [0, 0], sizes = [32, 128], strides = [1, 1]} : vector<96x128xf32> to vector<32x128xf32>
    %c0_44 = arith.constant 0 : index
    %c2_45 = arith.constant 2 : index
    %85 = vector.load %arg7[%c0_44, %c2_45] : memref<32x8xf32, #tpu.memory_space<vmem>>, vector<32x1xf32>
    %86 = vector.broadcast %85 : vector<32x1xf32> to vector<32x128xf32>
    %87 = arith.addf %84, %86 : vector<32x128xf32>
    %88 = arith.negf %87 : vector<32x128xf32>
    %89 = math.exp %88 : vector<32x128xf32>
    %cst_46 = arith.constant 1.000000e+00 : f32
    %90 = vector.broadcast %cst_46 : f32 to vector<32x128xf32>
    %91 = arith.addf %90, %89 : vector<32x128xf32>
    %92 = arith.divf %90, %91 : vector<32x128xf32>
    %93 = vector.extract_strided_slice %81 {offsets = [32, 0], sizes = [32, 128], strides = [1, 1]} : vector<96x128xf32> to vector<32x128xf32>
    %c0_47 = arith.constant 0 : index
    %c3_48 = arith.constant 3 : index
    %94 = vector.load %arg7[%c0_47, %c3_48] : memref<32x8xf32, #tpu.memory_space<vmem>>, vector<32x1xf32>
    %95 = vector.broadcast %94 : vector<32x1xf32> to vector<32x128xf32>
    %96 = arith.addf %93, %95 : vector<32x128xf32>
    %97 = arith.negf %96 : vector<32x128xf32>
    %98 = math.exp %97 : vector<32x128xf32>
    %cst_49 = arith.constant 1.000000e+00 : f32
    %99 = vector.broadcast %cst_49 : f32 to vector<32x128xf32>
    %100 = arith.addf %99, %98 : vector<32x128xf32>
    %101 = arith.divf %99, %100 : vector<32x128xf32>
    %c0_50 = arith.constant 0 : index
    %c0_51 = arith.constant 0 : index
    %102 = vector.load %arg6[%c0_50, %c0_51] : memref<32x32xbf16, #tpu.memory_space<vmem>>, vector<32x32xbf16>
    %103 = arith.mulf %92, %58 : vector<32x128xf32>
    %104 = arith.truncf %103 : vector<32x128xf32> to vector<32x128xbf16>
    %cst_52 = arith.constant dense<0.000000e+00> : vector<32x128xf32>
    %105 = tpu.matmul %102, %104, %cst_52 {dimension_numbers = #tpu.dot_dimension_numbers<[1], [0], [0], [1], [0, 0, 1, 1], [], []>} : vector<32x32xbf16>, vector<32x128xbf16>, vector<32x128xf32> -> vector<32x128xf32>
    %106 = arith.extf %83 : vector<32x128xbf16> to vector<32x128xf32>
    %107 = arith.addf %105, %106 : vector<32x128xf32>
    %c0_53 = arith.constant 0 : index
    %c4_54 = arith.constant 4 : index
    %108 = vector.load %arg7[%c0_53, %c4_54] : memref<32x8xf32, #tpu.memory_space<vmem>>, vector<32x1xf32>
    %109 = vector.broadcast %108 : vector<32x1xf32> to vector<32x128xf32>
    %110 = arith.addf %107, %109 : vector<32x128xf32>
    %111 = math.tanh %110 : vector<32x128xf32>
    %112 = arith.subf %58, %111 : vector<32x128xf32>
    %113 = arith.mulf %101, %112 : vector<32x128xf32>
    %114 = arith.addf %111, %113 : vector<32x128xf32>
    %115 = math.tanh %114 : vector<32x128xf32>
    %116 = arith.truncf %115 : vector<32x128xf32> to vector<32x128xbf16>
    %c0_55 = arith.constant 0 : index
    %c0_56 = arith.constant 0 : index
    %c0_57 = arith.constant 0 : index
    %117 = vector.load %arg1[%c0_55, %c0_56, %c0_57] : memref<1x128x128xbf16, #tpu.memory_space<vmem>>, vector<1x128x128xbf16>
    %118 = vector.shape_cast %117 : vector<1x128x128xbf16> to vector<128x128xbf16>
    %cst_58 = arith.constant dense<0.000000e+00> : vector<32x128xf32>
    %119 = tpu.matmul %116, %118, %cst_58 {dimension_numbers = #tpu.dot_dimension_numbers<[1], [0], [0], [1], [0, 0, 1, 1], [], []>} : vector<32x128xbf16>, vector<128x128xbf16>, vector<32x128xf32> -> vector<32x128xf32>
    %c0_59 = arith.constant 0 : index
    %c0_60 = arith.constant 0 : index
    %120 = vector.load %arg3[%c0_59, %c0_60] : memref<32x32xbf16, #tpu.memory_space<vmem>>, vector<32x32xbf16>
    %121 = arith.truncf %119 : vector<32x128xf32> to vector<32x128xbf16>
    %cst_61 = arith.constant dense<0.000000e+00> : vector<32x128xf32>
    %122 = tpu.matmul %120, %121, %cst_61 {dimension_numbers = #tpu.dot_dimension_numbers<[1], [0], [0], [1], [0, 0, 1, 1], [], []>} : vector<32x32xbf16>, vector<32x128xbf16>, vector<32x128xf32> -> vector<32x128xf32>
    %c0_62 = arith.constant 0 : index
    %c0_63 = arith.constant 0 : index
    %123 = vector.load %arg7[%c0_62, %c0_63] : memref<32x8xf32, #tpu.memory_space<vmem>>, vector<32x1xf32>
    %124 = vector.broadcast %123 : vector<32x1xf32> to vector<32x128xf32>
    %125 = arith.addf %122, %124 : vector<32x128xf32>
    %cst_64 = arith.constant 0.000000e+00 : f32
    %126 = vector.broadcast %cst_64 : f32 to vector<32x128xf32>
    %127 = arith.maximumf %125, %126 : vector<32x128xf32>
    %c0_65 = arith.constant 0 : index
    %c0_66 = arith.constant 0 : index
    %128 = vector.load %arg4[%c0_65, %c0_66] : memref<32x32xbf16, #tpu.memory_space<vmem>>, vector<32x32xbf16>
    %129 = arith.truncf %127 : vector<32x128xf32> to vector<32x128xbf16>
    %cst_67 = arith.constant dense<0.000000e+00> : vector<32x128xf32>
    %130 = tpu.matmul %128, %129, %cst_67 {dimension_numbers = #tpu.dot_dimension_numbers<[1], [0], [0], [1], [0, 0, 1, 1], [], []>} : vector<32x32xbf16>, vector<32x128xbf16>, vector<32x128xf32> -> vector<32x128xf32>
    %c0_68 = arith.constant 0 : index
    %c1_69 = arith.constant 1 : index
    %131 = vector.load %arg7[%c0_68, %c1_69] : memref<32x8xf32, #tpu.memory_space<vmem>>, vector<32x1xf32>
    %132 = vector.broadcast %131 : vector<32x1xf32> to vector<32x128xf32>
    %133 = arith.addf %130, %132 : vector<32x128xf32>
    %134 = math.tanh %133 : vector<32x128xf32>
    %135 = arith.truncf %134 : vector<32x128xf32> to vector<32x128xbf16>
    %136 = tpu.concatenate %116, %135 in 0 : vector<32x128xbf16>, vector<32x128xbf16> -> vector<64x128xbf16>
    %c0_70 = arith.constant 0 : index
    %c0_71 = arith.constant 0 : index
    %137 = vector.load %arg5[%c0_70, %c0_71] : memref<96x64xbf16, #tpu.memory_space<vmem>>, vector<96x64xbf16>
    %cst_72 = arith.constant dense<0.000000e+00> : vector<96x128xf32>
    %138 = tpu.matmul %137, %136, %cst_72 {dimension_numbers = #tpu.dot_dimension_numbers<[1], [0], [0], [1], [0, 0, 1, 1], [], []>} : vector<96x64xbf16>, vector<64x128xbf16>, vector<96x128xf32> -> vector<96x128xf32>
    %139 = vector.extract_strided_slice %138 {offsets = [64, 0], sizes = [32, 128], strides = [1, 1]} : vector<96x128xf32> to vector<32x128xf32>
    %140 = arith.truncf %139 : vector<32x128xf32> to vector<32x128xbf16>
    %141 = vector.extract_strided_slice %138 {offsets = [0, 0], sizes = [32, 128], strides = [1, 1]} : vector<96x128xf32> to vector<32x128xf32>
    %c0_73 = arith.constant 0 : index
    %c2_74 = arith.constant 2 : index
    %142 = vector.load %arg7[%c0_73, %c2_74] : memref<32x8xf32, #tpu.memory_space<vmem>>, vector<32x1xf32>
    %143 = vector.broadcast %142 : vector<32x1xf32> to vector<32x128xf32>
    %144 = arith.addf %141, %143 : vector<32x128xf32>
    %145 = arith.negf %144 : vector<32x128xf32>
    %146 = math.exp %145 : vector<32x128xf32>
    %cst_75 = arith.constant 1.000000e+00 : f32
    %147 = vector.broadcast %cst_75 : f32 to vector<32x128xf32>
    %148 = arith.addf %147, %146 : vector<32x128xf32>
    %149 = arith.divf %147, %148 : vector<32x128xf32>
    %150 = vector.extract_strided_slice %138 {offsets = [32, 0], sizes = [32, 128], strides = [1, 1]} : vector<96x128xf32> to vector<32x128xf32>
    %c0_76 = arith.constant 0 : index
    %c3_77 = arith.constant 3 : index
    %151 = vector.load %arg7[%c0_76, %c3_77] : memref<32x8xf32, #tpu.memory_space<vmem>>, vector<32x1xf32>
    %152 = vector.broadcast %151 : vector<32x1xf32> to vector<32x128xf32>
    %153 = arith.addf %150, %152 : vector<32x128xf32>
    %154 = arith.negf %153 : vector<32x128xf32>
    %155 = math.exp %154 : vector<32x128xf32>
    %cst_78 = arith.constant 1.000000e+00 : f32
    %156 = vector.broadcast %cst_78 : f32 to vector<32x128xf32>
    %157 = arith.addf %156, %155 : vector<32x128xf32>
    %158 = arith.divf %156, %157 : vector<32x128xf32>
    %c0_79 = arith.constant 0 : index
    %c0_80 = arith.constant 0 : index
    %159 = vector.load %arg6[%c0_79, %c0_80] : memref<32x32xbf16, #tpu.memory_space<vmem>>, vector<32x32xbf16>
    %160 = arith.mulf %149, %115 : vector<32x128xf32>
    %161 = arith.truncf %160 : vector<32x128xf32> to vector<32x128xbf16>
    %cst_81 = arith.constant dense<0.000000e+00> : vector<32x128xf32>
    %162 = tpu.matmul %159, %161, %cst_81 {dimension_numbers = #tpu.dot_dimension_numbers<[1], [0], [0], [1], [0, 0, 1, 1], [], []>} : vector<32x32xbf16>, vector<32x128xbf16>, vector<32x128xf32> -> vector<32x128xf32>
    %163 = arith.extf %140 : vector<32x128xbf16> to vector<32x128xf32>
    %164 = arith.addf %162, %163 : vector<32x128xf32>
    %c0_82 = arith.constant 0 : index
    %c4_83 = arith.constant 4 : index
    %165 = vector.load %arg7[%c0_82, %c4_83] : memref<32x8xf32, #tpu.memory_space<vmem>>, vector<32x1xf32>
    %166 = vector.broadcast %165 : vector<32x1xf32> to vector<32x128xf32>
    %167 = arith.addf %164, %166 : vector<32x128xf32>
    %168 = math.tanh %167 : vector<32x128xf32>
    %169 = arith.subf %115, %168 : vector<32x128xf32>
    %170 = arith.mulf %158, %169 : vector<32x128xf32>
    %171 = arith.addf %168, %170 : vector<32x128xf32>
    %172 = math.tanh %171 : vector<32x128xf32>
    %c0_84 = arith.constant 0 : index
    %c0_85 = arith.constant 0 : index
    %c0_86 = arith.constant 0 : index
    %173 = vector.load %arg8[%c0_84, %c0_85, %c0_86] : memref<1x32x128xf32, #tpu.memory_space<vmem>>, vector<1x32x128xf32>
    %174 = vector.shape_cast %173 : vector<1x32x128xf32> to vector<32x128xf32>
    %175 = vector.shape_cast %172 : vector<32x128xf32> to vector<1x32x128xf32>
    tpu.vector_store %arg8[%c0_84, %c0_85, %c0_86], %175 {strides = array<i32>} : memref<1x32x128xf32, #tpu.memory_space<vmem>>, vector<1x32x128xf32>,
    return
  }
  func.func @transform_0(%arg0: i32) -> (i32, i32, i32) {
    %c0_i32 = arith.constant 0 : i32
    %c0_i32_0 = arith.constant 0 : i32
    %c0_i32_1 = arith.constant 0 : i32
    return %arg0, %c0_i32, %c0_i32_0 : i32, i32, i32
  }
  func.func @transform_1(%arg0: i32) -> (i32, i32, i32) {
    %c0_i32 = arith.constant 0 : i32
    %c0_i32_0 = arith.constant 0 : i32
    %c0_i32_1 = arith.constant 0 : i32
    return %arg0, %c0_i32, %c0_i32_0 : i32, i32, i32
  }
  func.func @transform_2(%arg0: i32) -> (i32, i32) {
    %c0_i32 = arith.constant 0 : i32
    %c0_i32_0 = arith.constant 0 : i32
    %c0_i32_1 = arith.constant 0 : i32
    return %c0_i32, %c0_i32_0 : i32, i32
  }
  func.func @transform_3(%arg0: i32) -> (i32, i32) {
    %c0_i32 = arith.constant 0 : i32
    %c0_i32_0 = arith.constant 0 : i32
    %c0_i32_1 = arith.constant 0 : i32
    return %c0_i32, %c0_i32_0 : i32, i32
  }
  func.func @transform_4(%arg0: i32) -> (i32, i32) {
    %c0_i32 = arith.constant 0 : i32
    %c0_i32_0 = arith.constant 0 : i32
    %c0_i32_1 = arith.constant 0 : i32
    return %c0_i32, %c0_i32_0 : i32, i32
  }
  func.func @transform_5(%arg0: i32) -> (i32, i32) {
    %c0_i32 = arith.constant 0 : i32
    %c0_i32_0 = arith.constant 0 : i32
    %c0_i32_1 = arith.constant 0 : i32
    return %c0_i32, %c0_i32_0 : i32, i32
  }
  func.func @transform_6(%arg0: i32) -> (i32, i32) {
    %c0_i32 = arith.constant 0 : i32
    %c0_i32_0 = arith.constant 0 : i32
    %c0_i32_1 = arith.constant 0 : i32
    return %c0_i32, %c0_i32_0 : i32, i32
  }
  func.func @transform_7(%arg0: i32) -> (i32, i32, i32) {
    %c0_i32 = arith.constant 0 : i32
    %c0_i32_0 = arith.constant 0 : i32
    %c0_i32_1 = arith.constant 0 : i32
    return %arg0, %c0_i32, %c0_i32_0 : i32, i32, i32
  }
}

</mosaic_0001>

<llo_original>
// kernel: gated_dvn_pallas.1
$region0: #{gated_dvn_pallas.1}
  #allocation0 [shape = 'u32[]', space=smem, size = 0x4, offset = 0x4, fixed_abs, tag = 'smem constant byte address 0x4 - core index']
  #allocation1 [shape = 'u32[144,128]{1,0:T(1,128)}', space=vmem, size = 0x12000, scoped, tag = 'internal scratch']
  %s0 = inlined_call_operand.vmem [shape: bf16[2,128,128], index: 0, kind: input, shape index: {}]
  %s1 = inlined_call_operand.vmem [shape: f32[2,32,128], index: 1, kind: input, shape index: {}]
  %s2 = inlined_call_operand.vmem [shape: bf16[32,32], index: 2, kind: input, shape index: {}]
  %s3 = inlined_call_operand.vmem [shape: bf16[32,32], index: 3, kind: input, shape index: {}]
  %s4 = inlined_call_operand.vmem [shape: bf16[96,64], index: 4, kind: input, shape index: {}]
  %s5 = inlined_call_operand.vmem [shape: bf16[32,32], index: 5, kind: input, shape index: {}]
  %s6 = inlined_call_operand.vmem [shape: f32[32,8], index: 6, kind: input, shape index: {}]
  %s7 = inlined_call_operand.vmem [shape: f32[2,32,128], index: 7, kind: output, shape index: {}]
  %s8 = sld [smem:[#allocation0]]
  $region61: #{gated_dvn_pallas.1} parent=0
    _
  %s10 = ssub.s32 1, %s8
  %s11 = scalar_select 0, %s10, %s8
  loop: start=0, step=1, limit=4
  $region2: #{gated_dvn_pallas.1} parent=0 // loop_pre_header
    _
  $region3: #{gated_dvn_pallas.1} parent=0 // loop_header
    %s13 = sphi 0, %s17
    %p14 = scmp.ge.s32.totalorder %s13, 4
    %s23 = sphi 0, %s25
    %s26 = sphi 0, %s23
    %s27 = sphi 0, %s26
    %s43 = sphi 0, %s27
    %s49 = sphi 0, %s51
    %s52 = sphi 0, %s49
    %s53 = sphi 0, %s52
    %s69 = sphi 0, %s53
    %s73 = sphi 0, %s73
    %s75 = sphi 0, %s73
    %s76 = sphi 0, %s75
    %s90 = sphi 0, %s76
    %s94 = sphi 0, %s94
    %s96 = sphi 0, %s94
    %s97 = sphi 0, %s96
    %s111 = sphi 0, %s97
    %s115 = sphi 0, %s115
    %s117 = sphi 0, %s115
    %s118 = sphi 0, %s117
    %s132 = sphi 0, %s118
    %s136 = sphi 0, %s136
    %s138 = sphi 0, %s136
    %s139 = sphi 0, %s138
    %s153 = sphi 0, %s139
    %s157 = sphi 0, %s157
    %s159 = sphi 0, %s157
    %s160 = sphi 0, %s159
    %s174 = sphi 0, %s160
    %s180 = sphi 0, %s182
    %s183 = sphi 0, %s180
    %s184 = sphi 0, %s183
    %s200 = sphi 0, %s184
  $region4: #{gated_dvn_pallas.1} parent=0 // loop_header_branch
    %16 = sbr.rel (%p14) target = $region8
  $region5: #{gated_dvn_pallas.1} parent=0 // loop_body
    %s18 = ssub.s32 %s13, 1
    %s19 = ssub.s32 %s13, 2
    %s20 = sadd.s32 %s13, 1
    %s21 = ssub.s32 %s13, %s20
    %p22 = scmp.eq.s32.totalorder %s21, 0
    %s24 = sadd.s32 %s23, 1
    %s25 = scalar_select %p22, %s23, %s24
    %p28 = pneg %p22
    %p29 = scmp.eq.s32.totalorder %s13, 1
    %p30 = por %p28, %p29
    %p31 = scmp.ne.s32.totalorder %s23, %s26
    %p32 = scmp.eq.s32.totalorder %s13, 0
    %p33 = por %p31, %p32
    %p34 = scmp.ne.s32.totalorder %s23, %s26
    %p35 = scmp.eq.s32.totalorder %s18, 1
    %p36 = por %p34, %p35
    %p37 = scmp.ne.s32.totalorder %s26, %s27
    %p38 = scmp.eq.s32.totalorder %s18, 0
    %p39 = por %p37, %p38
    %p40 = scmp.ne.s32.totalorder %s26, %s27
    %p41 = scmp.eq.s32.totalorder %s19, 1
    %p42 = por %p40, %p41
    %p44 = scmp.ne.s32.totalorder %s27, %s43
    %p45 = scmp.eq.s32.totalorder %s19, 0
    %p46 = por %p44, %p45
    %s47 = ssub.s32 %s13, %s20
    %p48 = scmp.eq.s32.totalorder %s47, 0
    %s50 = sadd.s32 %s49, 1
    %s51 = scalar_select %p48, %s49, %s50
    %p54 = pneg %p48
    %p55 = scmp.eq.s32.totalorder %s13, 1
    %p56 = por %p54, %p55
    %p57 = scmp.ne.s32.totalorder %s49, %s52
    %p58 = scmp.eq.s32.totalorder %s13, 0
    %p59 = por %p57, %p58
    %p60 = scmp.ne.s32.totalorder %s49, %s52
    %p61 = scmp.eq.s32.totalorder %s18, 1
    %p62 = por %p60, %p61
    %p63 = scmp.ne.s32.totalorder %s52, %s53
    %p64 = scmp.eq.s32.totalorder %s18, 0
    %p65 = por %p63, %p64
    %p66 = scmp.ne.s32.totalorder %s52, %s53
    %p67 = scmp.eq.s32.totalorder %s19, 1
    %p68 = por %p66, %p67
    %p70 = scmp.ne.s32.totalorder %s53, %s69
    %p71 = scmp.eq.s32.totalorder %s19, 0
    %p72 = por %p70, %p71
    %s74 = sadd.s32 %s73, 1
    %p77 = scmp.eq.s32.totalorder %s13, 1
    %p78 = scmp.ne.s32.totalorder %s73, %s75
    %p79 = scmp.eq.s32.totalorder %s13, 0
    %p80 = por %p78, %p79
    %p81 = scmp.ne.s32.totalorder %s73, %s75
    %p82 = scmp.eq.s32.totalorder %s18, 1
    %p83 = por %p81, %p82
    %p84 = scmp.ne.s32.totalorder %s75, %s76
    %p85 = scmp.eq.s32.totalorder %s18, 0
    %p86 = por %p84, %p85
    %p87 = scmp.ne.s32.totalorder %s75, %s76
    %p88 = scmp.eq.s32.totalorder %s19, 1
    %p89 = por %p87, %p88
    %p91 = scmp.ne.s32.totalorder %s76, %s90
    %p92 = scmp.eq.s32.totalorder %s19, 0
    %p93 = por %p91, %p92
    %s95 = sadd.s32 %s94, 1
    %p98 = scmp.eq.s32.totalorder %s13, 1
    %p99 = scmp.ne.s32.totalorder %s94, %s96
    %p100 = scmp.eq.s32.totalorder %s13, 0
    %p101 = por %p99, %p100
    %p102 = scmp.ne.s32.totalorder %s94, %s96
    %p103 = scmp.eq.s32.totalorder %s18, 1
    %p104 = por %p102, %p103
    %p105 = scmp.ne.s32.totalorder %s96, %s97
    %p106 = scmp.eq.s32.totalorder %s18, 0
    %p107 = por %p105, %p106
    %p108 = scmp.ne.s32.totalorder %s96, %s97
    %p109 = scmp.eq.s32.totalorder %s19, 1
    %p110 = por %p108, %p109
    %p112 = scmp.ne.s32.totalorder %s97, %s111
    %p113 = scmp.eq.s32.totalorder %s19, 0
    %p114 = por %p112, %p113
    %s116 = sadd.s32 %s115, 1
    %p119 = scmp.eq.s32.totalorder %s13, 1
    %p120 = scmp.ne.s32.totalorder %s115, %s117
    %p121 = scmp.eq.s32.totalorder %s13, 0
    %p122 = por %p120, %p121
    %p123 = scmp.ne.s32.totalorder %s115, %s117
    %p124 = scmp.eq.s32.totalorder %s18, 1
    %p125 = por %p123, %p124
    %p126 = scmp.ne.s32.totalorder %s117, %s118
    %p127 = scmp.eq.s32.totalorder %s18, 0
    %p128 = por %p126, %p127
    %p129 = scmp.ne.s32.totalorder %s117, %s118
    %p130 = scmp.eq.s32.totalorder %s19, 1
    %p131 = por %p129, %p130
    %p133 = scmp.ne.s32.totalorder %s118, %s132
    %p134 = scmp.eq.s32.totalorder %s19, 0
    %p135 = por %p133, %p134
    %s137 = sadd.s32 %s136, 1
    %p140 = scmp.eq.s32.totalorder %s13, 1
    %p141 = scmp.ne.s32.totalorder %s136, %s138
    %p142 = scmp.eq.s32.totalorder %s13, 0
    %p143 = por %p141, %p142
    %p144 = scmp.ne.s32.totalorder %s136, %s138
    %p145 = scmp.eq.s32.totalorder %s18, 1
    %p146 = por %p144, %p145
    %p147 = scmp.ne.s32.totalorder %s138, %s139
    %p148 = scmp.eq.s32.totalorder %s18, 0
    %p149 = por %p147, %p148
    %p150 = scmp.ne.s32.totalorder %s138, %s139
    %p151 = scmp.eq.s32.totalorder %s19, 1
    %p152 = por %p150, %p151
    %p154 = scmp.ne.s32.totalorder %s139, %s153
    %p155 = scmp.eq.s32.totalorder %s19, 0
    %p156 = por %p154, %p155
    %s158 = sadd.s32 %s157, 1
    %p161 = scmp.eq.s32.totalorder %s13, 1
    %p162 = scmp.ne.s32.totalorder %s157, %s159
    %p163 = scmp.eq.s32.totalorder %s13, 0
    %p164 = por %p162, %p163
    %p165 = scmp.ne.s32.totalorder %s157, %s159
    %p166 = scmp.eq.s32.totalorder %s18, 1
    %p167 = por %p165, %p166
    %p168 = scmp.ne.s32.totalorder %s159, %s160
    %p169 = scmp.eq.s32.totalorder %s18, 0
    %p170 = por %p168, %p169
    %p171 = scmp.ne.s32.totalorder %s159, %s160
    %p172 = scmp.eq.s32.totalorder %s19, 1
    %p173 = por %p171, %p172
    %p175 = scmp.ne.s32.totalorder %s160, %s174
    %p176 = scmp.eq.s32.totalorder %s19, 0
    %p177 = por %p175, %p176
    %s178 = ssub.s32 %s13, %s20
    %p179 = scmp.eq.s32.totalorder %s178, 0
    %s181 = sadd.s32 %s180, 1
    %s182 = scalar_select %p179, %s180, %s181
    %p185 = pneg %p179
    %p186 = scmp.eq.s32.totalorder %s13, 1
    %p187 = por %p185, %p186
    %p188 = scmp.ne.s32.totalorder %s180, %s183
    %p189 = scmp.eq.s32.totalorder %s13, 0
    %p190 = por %p188, %p189
    %p191 = scmp.ne.s32.totalorder %s180, %s183
    %p192 = scmp.eq.s32.totalorder %s18, 1
    %p193 = por %p191, %p192
    %p194 = scmp.ne.s32.totalorder %s183, %s184
    %p195 = scmp.eq.s32.totalorder %s18, 0
    %p196 = por %p194, %p195
    %p197 = scmp.ne.s32.totalorder %s183, %s184
    %p198 = scmp.eq.s32.totalorder %s19, 1
    %p199 = por %p197, %p198
    %p201 = scmp.ne.s32.totalorder %s184, %s200
    %p202 = scmp.eq.s32.totalorder %s19, 0
    %p203 = por %p201, %p202
    %p204 = scmp.le.s32.totalorder 1, %s13
    %p205 = scmp.lt.s32.totalorder %s13, 3
    %p206 = pnand %p204, %p205
    %p207 = pneg %p206
    // Predicated region
    $region9: #{gated_dvn_pallas.1} parent=5 // pred_check
      _
    $region10: #{gated_dvn_pallas.1} parent=5 // pred_check_branch
      %209 = sbr.rel (%p206) target = $region12
    $region11: #{gated_dvn_pallas.1} parent=5 // pred_region
      %s210 = ssub.s32 %s13, 1
      // Predicated region
      $region13: #{gated_dvn_pallas.1} parent=11 // pred_check
        %p211 = pneg %p86
      $region14: #{gated_dvn_pallas.1} parent=11 // pred_check_branch
        %213 = sbr.rel (%p211) target = $region16
      $region15: #{gated_dvn_pallas.1} parent=11 // pred_region
        _
      $region16: #{gated_dvn_pallas.1} parent=11 // pred_fallthru
        _
      // Predicated region
      $region17: #{gated_dvn_pallas.1} parent=11 // pred_check
        %p214 = pneg %p107
      $region18: #{gated_dvn_pallas.1} parent=11 // pred_check_branch
        %216 = sbr.rel (%p214) target = $region20
      $region19: #{gated_dvn_pallas.1} parent=11 // pred_region
        _
      $region20: #{gated_dvn_pallas.1} parent=11 // pred_fallthru
        _
      // Predicated region
      $region21: #{gated_dvn_pallas.1} parent=11 // pred_check
        %p217 = pneg %p128
      $region22: #{gated_dvn_pallas.1} parent=11 // pred_check_branch
        %219 = sbr.rel (%p217) target = $region24
      $region23: #{gated_dvn_pallas.1} parent=11 // pred_region
        _
      $region24: #{gated_dvn_pallas.1} parent=11 // pred_fallthru
        _
      // Predicated region
      $region25: #{gated_dvn_pallas.1} parent=11 // pred_check
        %p220 = pneg %p149
      $region26: #{gated_dvn_pallas.1} parent=11 // pred_check_branch
        %222 = sbr.rel (%p220) target = $region28
      $region27: #{gated_dvn_pallas.1} parent=11 // pred_region
        _
      $region28: #{gated_dvn_pallas.1} parent=11 // pred_fallthru
        _
      // Predicated region
      $region29: #{gated_dvn_pallas.1} parent=11 // pred_check
        %p223 = pneg %p170
      $region30: #{gated_dvn_pallas.1} parent=11 // pred_check_branch
        %225 = sbr.rel (%p223) target = $region32
      $region31: #{gated_dvn_pallas.1} parent=11 // pred_region
        _
      $region32: #{gated_dvn_pallas.1} parent=11 // pred_fallthru
        _
    $region12: #{gated_dvn_pallas.1} parent=5 // pred_fallthru
      _
    %p226 = scmp.lt.s32.totalorder %s13, 2
    // Predicated region
    $region33: #{gated_dvn_pallas.1} parent=5 // pred_check
      %p227 = pneg %p226
    $region34: #{gated_dvn_pallas.1} parent=5 // pred_check_branch
      %229 = sbr.rel (%p227) target = $region36
    $region35: #{gated_dvn_pallas.1} parent=5 // pred_region
      // Predicated region
      $region37: #{gated_dvn_pallas.1} parent=35 // pred_check
        %p230 = pneg %p33
      $region38: #{gated_dvn_pallas.1} parent=35 // pred_check_branch
        %232 = sbr.rel (%p230) target = $region40
      $region39: #{gated_dvn_pallas.1} parent=35 // pred_region
        %p233 = scmp.lt.s32.totalorder %s13, 1
        %s234 = scalar_select %p233, %s13, 1
        %s235 = smul.addr %s234, 16
        %s236 = smul.addr %s235, 4
        %s237 = scalar_lea.vmem %s0, %s236
      $region40: #{gated_dvn_pallas.1} parent=35 // pred_fallthru
        _
      // Predicated region
      $region41: #{gated_dvn_pallas.1} parent=35 // pred_check
        %p238 = pneg %p59
      $region42: #{gated_dvn_pallas.1} parent=35 // pred_check_branch
        %240 = sbr.rel (%p238) target = $region44
      $region43: #{gated_dvn_pallas.1} parent=35 // pred_region
        %p241 = scmp.lt.s32.totalorder %s13, 1
        %s242 = scalar_select %p241, %s13, 1
        %s243 = smul.addr %s242, 4
        %s244 = smul.addr %s243, 8
        %s245 = scalar_lea.vmem %s1, %s244
      $region44: #{gated_dvn_pallas.1} parent=35 // pred_fallthru
        _
    $region36: #{gated_dvn_pallas.1} parent=5 // pred_fallthru
      _
    %p246 = scmp.le.s32.totalorder 1, %s13
    %p247 = scmp.lt.s32.totalorder %s13, 3
    %p248 = pnand %p246, %p247
    %p249 = pneg %p248
    // Predicated region
    $region45: #{gated_dvn_pallas.1} parent=5 // pred_check
      _
    $region46: #{gated_dvn_pallas.1} parent=5 // pred_check_branch
      %251 = sbr.rel (%p248) target = $region48
    $region47: #{gated_dvn_pallas.1} parent=5 // pred_region
      %s252 = ssub.s32 %s13, 1
      %p253 = scmp.lt.s32.totalorder %s18, 1
      %s254 = scalar_select %p253, %s18, 1
      %s255 = smul.addr %s254, 16
      %s256 = smul.addr %s255, 4
      %s257 = scalar_lea.vmem %s0, %s256
      %p258 = pneg %p39
      %p259 = pneg %p36
      %p260 = scmp.lt.s32.totalorder %s18, 1
      %s261 = scalar_select %p260, %s18, 1
      %s262 = smul.addr %s261, 4
      %s263 = smul.addr %s262, 8
      %s264 = scalar_lea.vmem %s1, %s263
      %p265 = pneg %p65
      %p266 = pneg %p62
      %p267 = pneg %p86
      %p268 = pneg %p83
      %p269 = pneg %p107
      %p270 = pneg %p104
      %p271 = pneg %p128
      %p272 = pneg %p125
      %p273 = pneg %p149
      %p274 = pneg %p146
      %p275 = pneg %p170
      %p276 = pneg %p167
      %p277 = pneg %p196
      %p278 = pneg %p193
      %p279 = scmp.lt.s32.totalorder %s18, 1
      %s280 = scalar_select %p279, %s18, 1
      %s281 = smul.addr %s280, 4
      %s282 = smul.addr %s281, 8
      %s283 = scalar_lea.vmem %s7, %s282
      %p284 = scmp.lt.s32.totalorder %s18, 1
      %s285 = scalar_select %p284, %s18, 1
      %s286 = smul.addr %s285, 16
      %s287 = smul.addr %s286, 4
      %s288 = scalar_lea.vmem %s0, %s287
      %p289 = scmp.lt.s32.totalorder %s18, 1
      %s290 = scalar_select %p289, %s18, 1
      %s291 = smul.addr %s290, 4
      %s292 = smul.addr %s291, 8
      %s293 = scalar_lea.vmem %s1, %s292
      %p294 = scmp.lt.s32.totalorder %s18, 1
      %s295 = scalar_select %p294, %s18, 1
      %s296 = smul.addr %s295, 4
      %s297 = smul.addr %s296, 8
      %s298 = scalar_lea.vmem %s7, %s297
      %v300 = vld [vmem:[%s293] sm:$0xff]
      %v301 = vld [vmem:[%s293 + $0x8] sm:$0xff]
      %v302 = vld [vmem:[%s293 + $0x10] sm:$0xff]
      %v303 = vld [vmem:[%s293 + $0x18] sm:$0xff]
      %v304 = vpack.c.bf16 %v301, %v300
      %v305 = vpack.c.bf16 %v303, %v302
      %v306 = vld [vmem:[%s288] sm:$0xf]
      %v307 = vld [vmem:[%s288 + $0x4] sm:$0xf]
      %v308 = vld [vmem:[%s288 + $0x8] sm:$0xf]
      %v309 = vld [vmem:[%s288 + $0xc] sm:$0xf]
      %v310 = vld [vmem:[%s288 + $0x10] sm:$0xf]
      %v311 = vld [vmem:[%s288 + $0x14] sm:$0xf]
      %v312 = vld [vmem:[%s288 + $0x18] sm:$0xf]
      %v313 = vld [vmem:[%s288 + $0x1c] sm:$0xf]
      %v314 = vld [vmem:[%s288 + $0x20] sm:$0xf]
      %v315 = vld [vmem:[%s288 + $0x24] sm:$0xf]
      %v316 = vld [vmem:[%s288 + $0x28] sm:$0xf]
      %v317 = vld [vmem:[%s288 + $0x2c] sm:$0xf]
      %v318 = vld [vmem:[%s288 + $0x30] sm:$0xf]
      %v319 = vld [vmem:[%s288 + $0x34] sm:$0xf]
      %v320 = vld [vmem:[%s288 + $0x38] sm:$0xf]
      %v321 = vld [vmem:[%s288 + $0x3c] sm:$0xf]
      %v338 = vunpack.c.l.b16 %v306
      %v339 = vunpack.c.l.b16 %v307
      %v340 = vunpack.c.l.b16 %v308
      %v341 = vunpack.c.l.b16 %v309
      %v342 = vunpack.c.l.b16 %v310
      %v343 = vunpack.c.l.b16 %v311
      %v344 = vunpack.c.l.b16 %v312
      %v345 = vunpack.c.l.b16 %v313
      %v346 = vunpack.c.l.b16 %v314
      %v347 = vunpack.c.l.b16 %v315
      %v348 = vunpack.c.l.b16 %v316
      %v349 = vunpack.c.l.b16 %v317
      %v350 = vunpack.c.l.b16 %v318
      %v351 = vunpack.c.l.b16 %v319
      %v352 = vunpack.c.l.b16 %v320
      %v353 = vunpack.c.l.b16 %v321
      %v354 = vpack.c.b16 %v339, %v338
      %v355 = vpack.c.b16 %v341, %v340
      %v356 = vpack.c.b16 %v343, %v342
      %v357 = vpack.c.b16 %v345, %v344
      %v358 = vpack.c.b16 %v347, %v346
      %v359 = vpack.c.b16 %v349, %v348
      %v360 = vpack.c.b16 %v351, %v350
      %v361 = vpack.c.b16 %v353, %v352
      %370 = vmatprep.subr.bf16.mxu0 0
      %371 = vmatpush1.bf16.msra.mxu0 %v354
      %372 = vmatprep.subr.bf16.mxu0 0
      %373 = vmatpush1.bf16.msra.mxu0 %v355
      %374 = vmatprep.subr.bf16.mxu0 0
      %375 = vmatpush1.bf16.msra.mxu0 %v356
      %376 = vmatprep.subr.bf16.mxu0 0
      %377 = vmatpush1.bf16.msra.mxu0 %v357
      %378 = vmatprep.subr.bf16.mxu0 0
      %379 = vmatpush1.bf16.msra.mxu0 %v358
      %380 = vmatprep.subr.bf16.mxu0 0
      %381 = vmatpush1.bf16.msra.mxu0 %v359
      %382 = vmatprep.subr.bf16.mxu0 0
      %383 = vmatpush1.bf16.msra.mxu0 %v360
      %384 = vmatprep.subr.bf16.mxu0 0
      %385 = vmatpush1.bf16.msra.mxu0 %v361
      %386 = vmatprep.subr.bf16.mxu0 0
      %387 = vmatpush1.bf16.msra.mxu0 0
      %388 = vmatprep.subr.bf16.mxu0 0
      %389 = vmatpush1.bf16.msra.mxu0 0
      %390 = vmatprep.subr.bf16.mxu0 0
      %391 = vmatpush1.bf16.msra.mxu0 0
      %392 = vmatprep.subr.bf16.mxu0 0
      %393 = vmatpush1.bf16.msra.mxu0 0
      %394 = vmatprep.subr.bf16.mxu0 0
      %395 = vmatpush1.bf16.msra.mxu0 0
      %396 = vmatprep.subr.bf16.mxu0 0
      %397 = vmatpush1.bf16.msra.mxu0 0
      %398 = vmatprep.subr.bf16.mxu0 0
      %399 = vmatpush1.bf16.msra.mxu0 0
      %400 = vmatprep.subr.bf16.mxu0 0
      %401 = vmatpush1.bf16.msra.mxu0 0
      %402 = vmatprep.mubr.bf16.mxu0 0
      %403 = vmatmul.mubr.bf16.gmra.mrb[0].mxu0 %v304
      %v404 = vpop.f32.mrb[0].mxu0
      %v405 = vadd.f32 0.0, %v404
      %v406 = vpop.f32.mrb[0].mxu0
      %v407 = vpop.f32.mrb[0].mxu0
      %v408 = vadd.f32 0.0, %v407
      %v409 = vpop.f32.mrb[0].mxu0
      %410 = vmatprep.mubr.bf16.mxu0 0
      %411 = vmatmul.mubr.bf16.gmra.mrb[0].mxu0 %v305
      %v412 = vpop.f32.mrb[0].mxu0
      %v413 = vadd.f32 0.0, %v412
      %v414 = vpop.f32.mrb[0].mxu0
      %v415 = vpop.f32.mrb[0].mxu0
      %v416 = vadd.f32 0.0, %v415
      %v417 = vpop.f32.mrb[0].mxu0
      %418 = vdwg.mxu0
      %v419 = vld [vmem:[%s2] sm:$0xf]
      %v420 = vld [vmem:[%s2 + $0x4] sm:$0xf]
      %v421 = vld [vmem:[%s2 + $0x8] sm:$0xf]
      %v422 = vld [vmem:[%s2 + $0xc] sm:$0xf]
      %v423 = vpack.c.bf16 %v408, %v405
      %v424 = vpack.c.bf16 %v416, %v413
      %v425 = vld [vmem:[%s6] sm:$0xff]
      %v426 = vld [vmem:[%s6 + $0x8] sm:$0xff]
      %v427 = vld [vmem:[%s6 + $0x10] sm:$0xff]
      %v428 = vld [vmem:[%s6 + $0x18] sm:$0xff]
      %430 = vset.pattern.permute.xlu0 0
      %431 = vperm.xlu0 %430, %v425
      %v432 = vpop.permute.xlu0 %431
      %435 = vset.pattern.permute.xlu0 0
      %436 = vperm.xlu0 %435, %v426
      %v437 = vpop.permute.xlu0 %436
      %440 = vset.pattern.permute.xlu0 0
      %441 = vperm.xlu0 %440, %v427
      %v442 = vpop.permute.xlu0 %441
      %445 = vset.pattern.permute.xlu0 0
      %446 = vperm.xlu0 %445, %v428
      %v447 = vpop.permute.xlu0 %446
      %v453 = vunpack.c.l.b16 %v419
      %v454 = vunpack.c.l.b16 %v420
      %v455 = vunpack.c.l.b16 %v421
      %v456 = vunpack.c.l.b16 %v422
      %v457 = vpack.c.b16 %v454, %v453
      %v458 = vpack.c.b16 %v456, %v455
      %vm459 = vcmask 261120
      %v461 = vsel %vm459, %v457, 0
      %v464 = vsel %vm459, %v458, 0
      %466 = vmatprep.subr.bf16.mxu0 0
      %467 = vmatpush1.bf16.msra.mxu0 %v423
      %468 = vmatprep.subr.bf16.mxu0 0
      %469 = vmatpush1.bf16.msra.mxu0 %v424
      %470 = vmatprep.subr.bf16.mxu0 0
      %471 = vmatpush1.bf16.msra.mxu0 0
      %472 = vmatprep.subr.bf16.mxu0 0
      %473 = vmatpush1.bf16.msra.mxu0 0
      %474 = vmatprep.subr.bf16.mxu0 0
      %475 = vmatpush1.bf16.msra.mxu0 0
      %476 = vmatprep.subr.bf16.mxu0 0
      %477 = vmatpush1.bf16.msra.mxu0 0
      %478 = vmatprep.subr.bf16.mxu0 0
      %479 = vmatpush1.bf16.msra.mxu0 0
      %480 = vmatprep.subr.bf16.mxu0 0
      %481 = vmatpush1.bf16.msra.mxu0 0
      %482 = vmatprep.subr.bf16.mxu0 0
      %483 = vmatpush1.bf16.msra.mxu0 0
      %484 = vmatprep.subr.bf16.mxu0 0
      %485 = vmatpush1.bf16.msra.mxu0 0
      %486 = vmatprep.subr.bf16.mxu0 0
      %487 = vmatpush1.bf16.msra.mxu0 0
      %488 = vmatprep.subr.bf16.mxu0 0
      %489 = vmatpush1.bf16.msra.mxu0 0
      %490 = vmatprep.subr.bf16.mxu0 0
      %491 = vmatpush1.bf16.msra.mxu0 0
      %492 = vmatprep.subr.bf16.mxu0 0
      %493 = vmatpush1.bf16.msra.mxu0 0
      %494 = vmatprep.subr.bf16.mxu0 0
      %495 = vmatpush1.bf16.msra.mxu0 0
      %496 = vmatprep.subr.bf16.mxu0 0
      %497 = vmatpush1.bf16.msra.mxu0 0
      %498 = vmatprep.mubr.bf16.mxu0 0
      %499 = vmatmul.mubr.bf16.gmra.mrb[0].mxu0 %v461
      %v500 = vpop.f32.mrb[0].mxu0
      %v501 = vadd.f32 %v432, %v500
      %v502 = vpop.f32.mrb[0].mxu0
      %v503 = vpop.f32.mrb[0].mxu0
      %v504 = vadd.f32 %v437, %v503
      %v505 = vpop.f32.mrb[0].mxu0
      %506 = vmatprep.mubr.bf16.mxu0 0
      %507 = vmatmul.mubr.bf16.gmra.mrb[0].mxu0 %v464
      %v508 = vpop.f32.mrb[0].mxu0
      %v509 = vadd.f32 %v442, %v508
      %v510 = vpop.f32.mrb[0].mxu0
      %v511 = vpop.f32.mrb[0].mxu0
      %v512 = vadd.f32 %v447, %v511
      %v513 = vpop.f32.mrb[0].mxu0
      %514 = vdwg.mxu0
      %v515 = vmax.f32 %v501, 0.0
      %v516 = vmax.f32 %v504, 0.0
      %v517 = vmax.f32 %v509, 0.0
      %v518 = vmax.f32 %v512, 0.0
      %v519 = vld [vmem:[%s3] sm:$0xf]
      %v520 = vld [vmem:[%s3 + $0x4] sm:$0xf]
      %v521 = vld [vmem:[%s3 + $0x8] sm:$0xf]
      %v522 = vld [vmem:[%s3 + $0xc] sm:$0xf]
      %v523 = vpack.c.bf16 %v516, %v515
      %v524 = vpack.c.bf16 %v518, %v517
      %525 = vset.pattern.permute.xlu0 1
      %526 = vperm.xlu0 %525, %v425
      %v527 = vpop.permute.xlu0 %526
      %529 = vset.pattern.permute.xlu0 1
      %530 = vperm.xlu0 %529, %v426
      %v531 = vpop.permute.xlu0 %530
      %533 = vset.pattern.permute.xlu0 1
      %534 = vperm.xlu0 %533, %v427
      %v535 = vpop.permute.xlu0 %534
      %537 = vset.pattern.permute.xlu0 1
      %538 = vperm.xlu0 %537, %v428
      %v539 = vpop.permute.xlu0 %538
      %v545 = vunpack.c.l.b16 %v519
      %v546 = vunpack.c.l.b16 %v520
      %v547 = vunpack.c.l.b16 %v521
      %v548 = vunpack.c.l.b16 %v522
      %v549 = vpack.c.b16 %v546, %v545
      %v550 = vpack.c.b16 %v548, %v547
      %v552 = vsel %vm459, %v549, 0
      %v555 = vsel %vm459, %v550, 0
      %557 = vmatprep.subr.bf16.mxu0 0
      %558 = vmatpush1.bf16.msra.mxu0 %v523
      %559 = vmatprep.subr.bf16.mxu0 0
      %560 = vmatpush1.bf16.msra.mxu0 %v524
      %561 = vmatprep.subr.bf16.mxu0 0
      %562 = vmatpush1.bf16.msra.mxu0 0
      %563 = vmatprep.subr.bf16.mxu0 0
      %564 = vmatpush1.bf16.msra.mxu0 0
      %565 = vmatprep.subr.bf16.mxu0 0
      %566 = vmatpush1.bf16.msra.mxu0 0
      %567 = vmatprep.subr.bf16.mxu0 0
      %568 = vmatpush1.bf16.msra.mxu0 0
      %569 = vmatprep.subr.bf16.mxu0 0
      %570 = vmatpush1.bf16.msra.mxu0 0
      %571 = vmatprep.subr.bf16.mxu0 0
      %572 = vmatpush1.bf16.msra.mxu0 0
      %573 = vmatprep.subr.bf16.mxu0 0
      %574 = vmatpush1.bf16.msra.mxu0 0
      %575 = vmatprep.subr.bf16.mxu0 0
      %576 = vmatpush1.bf16.msra.mxu0 0
      %577 = vmatprep.subr.bf16.mxu0 0
      %578 = vmatpush1.bf16.msra.mxu0 0
      %579 = vmatprep.subr.bf16.mxu0 0
      %580 = vmatpush1.bf16.msra.mxu0 0
      %581 = vmatprep.subr.bf16.mxu0 0
      %582 = vmatpush1.bf16.msra.mxu0 0
      %583 = vmatprep.subr.bf16.mxu0 0
      %584 = vmatpush1.bf16.msra.mxu0 0
      %585 = vmatprep.subr.bf16.mxu0 0
      %586 = vmatpush1.bf16.msra.mxu0 0
      %587 = vmatprep.subr.bf16.mxu0 0
      %588 = vmatpush1.bf16.msra.mxu0 0
      %589 = vmatprep.mubr.bf16.mxu0 0
      %590 = vmatmul.mubr.bf16.gmra.mrb[0].mxu0 %v552
      %v591 = vpop.f32.mrb[0].mxu0
      %v592 = vadd.f32 %v527, %v591
      %v593 = vpop.f32.mrb[0].mxu0
      %v594 = vpop.f32.mrb[0].mxu0
      %v595 = vadd.f32 %v531, %v594
      %v596 = vpop.f32.mrb[0].mxu0
      %597 = vmatprep.mubr.bf16.mxu0 0
      %598 = vmatmul.mubr.bf16.gmra.mrb[0].mxu0 %v555
      %v599 = vpop.f32.mrb[0].mxu0
      %v600 = vadd.f32 %v535, %v599
      %v601 = vpop.f32.mrb[0].mxu0
      %v602 = vpop.f32.mrb[0].mxu0
      %v603 = vadd.f32 %v539, %v602
      %v604 = vpop.f32.mrb[0].mxu0
      %605 = vdwg.mxu0
      %v606 = vtanh.pop %v592
      %v607 = vtanh.pop %v595
      %v608 = vtanh.pop %v600
      %v609 = vtanh.pop %v603
      %v610 = vpack.c.bf16 %v607, %v606
      %v611 = vpack.c.bf16 %v609, %v608
      %v612 = vld [vmem:[%s4] sm:$0xf]
      %v613 = vld [vmem:[%s4 + $0x4] sm:$0xf]
      %v614 = vld [vmem:[%s4 + $0x8] sm:$0xf]
      %v615 = vld [vmem:[%s4 + $0xc] sm:$0xf]
      %v616 = vld [vmem:[%s4 + $0x10] sm:$0xf]
      %v617 = vld [vmem:[%s4 + $0x14] sm:$0xf]
      %v618 = vld [vmem:[%s4 + $0x18] sm:$0xf]
      %v619 = vld [vmem:[%s4 + $0x1c] sm:$0xf]
      %v620 = vld [vmem:[%s4 + $0x20] sm:$0xf]
      %v621 = vld [vmem:[%s4 + $0x24] sm:$0xf]
      %v622 = vld [vmem:[%s4 + $0x28] sm:$0xf]
      %v623 = vld [vmem:[%s4 + $0x2c] sm:$0xf]
      %v636 = vunpack.c.l.b16 %v612
      %v637 = vunpack.c.l.b16 %v613
      %v638 = vunpack.c.l.b16 %v614
      %v639 = vunpack.c.l.b16 %v615
      %v640 = vunpack.c.l.b16 %v616
      %v641 = vunpack.c.l.b16 %v617
      %v642 = vunpack.c.l.b16 %v618
      %v643 = vunpack.c.l.b16 %v619
      %v644 = vunpack.c.l.b16 %v620
      %v645 = vunpack.c.l.b16 %v621
      %v646 = vunpack.c.l.b16 %v622
      %v647 = vunpack.c.l.b16 %v623
      %v648 = vpack.c.b16 %v637, %v636
      %v649 = vpack.c.b16 %v639, %v638
      %v650 = vpack.c.b16 %v641, %v640
      %v651 = vpack.c.b16 %v643, %v642
      %v652 = vpack.c.b16 %v645, %v644
      %v653 = vpack.c.b16 %v647, %v646
      %vm654 = vcmask 523264
      %v656 = vsel %vm654, %v648, 0
      %v659 = vsel %vm654, %v649, 0
      %v662 = vsel %vm654, %v650, 0
      %v665 = vsel %vm654, %v651, 0
      %v668 = vsel %vm654, %v652, 0
      %v671 = vsel %vm654, %v653, 0
      %673 = vmatprep.subr.bf16.mxu0 0
      %674 = vmatpush1.bf16.msra.mxu0 %v304
      %675 = vmatprep.subr.bf16.mxu0 0
      %676 = vmatpush1.bf16.msra.mxu0 %v305
      %677 = vmatprep.subr.bf16.mxu0 0
      %678 = vmatpush1.bf16.msra.mxu0 %v610
      %679 = vmatprep.subr.bf16.mxu0 0
      %680 = vmatpush1.bf16.msra.mxu0 %v611
      %681 = vmatprep.subr.bf16.mxu0 0
      %682 = vmatpush1.bf16.msra.mxu0 0
      %683 = vmatprep.subr.bf16.mxu0 0
      %684 = vmatpush1.bf16.msra.mxu0 0
      %685 = vmatprep.subr.bf16.mxu0 0
      %686 = vmatpush1.bf16.msra.mxu0 0
      %687 = vmatprep.subr.bf16.mxu0 0
      %688 = vmatpush1.bf16.msra.mxu0 0
      %689 = vmatprep.subr.bf16.mxu0 0
      %690 = vmatpush1.bf16.msra.mxu0 0
      %691 = vmatprep.subr.bf16.mxu0 0
      %692 = vmatpush1.bf16.msra.mxu0 0
      %693 = vmatprep.subr.bf16.mxu0 0
      %694 = vmatpush1.bf16.msra.mxu0 0
      %695 = vmatprep.subr.bf16.mxu0 0
      %696 = vmatpush1.bf16.msra.mxu0 0
      %697 = vmatprep.subr.bf16.mxu0 0
      %698 = vmatpush1.bf16.msra.mxu0 0
      %699 = vmatprep.subr.bf16.mxu0 0
      %700 = vmatpush1.bf16.msra.mxu0 0
      %701 = vmatprep.subr.bf16.mxu0 0
      %702 = vmatpush1.bf16.msra.mxu0 0
      %703 = vmatprep.subr.bf16.mxu0 0
      %704 = vmatpush1.bf16.msra.mxu0 0
      %705 = vmatprep.mubr.bf16.mxu0 0
      %706 = vmatmul.mubr.bf16.gmra.mrb[0].mxu0 %v656
      %v707 = vpop.f32.mrb[0].mxu0
      %v708 = vadd.f32 0.0, %v707
      %v709 = vpop.f32.mrb[0].mxu0
      %v710 = vpop.f32.mrb[0].mxu0
      %v711 = vadd.f32 0.0, %v710
      %v712 = vpop.f32.mrb[0].mxu0
      %713 = vmatprep.mubr.bf16.mxu0 0
      %714 = vmatmul.mubr.bf16.gmra.mrb[0].mxu0 %v659
      %v715 = vpop.f32.mrb[0].mxu0
      %v716 = vadd.f32 0.0, %v715
      %v717 = vpop.f32.mrb[0].mxu0
      %v718 = vpop.f32.mrb[0].mxu0
      %v719 = vadd.f32 0.0, %v718
      %v720 = vpop.f32.mrb[0].mxu0
      %721 = vmatprep.mubr.bf16.mxu0 0
      %722 = vmatmul.mubr.bf16.gmra.mrb[0].mxu0 %v662
      %v723 = vpop.f32.mrb[0].mxu0
      %v724 = vadd.f32 0.0, %v723
      %v725 = vpop.f32.mrb[0].mxu0
      %v726 = vpop.f32.mrb[0].mxu0
      %v727 = vadd.f32 0.0, %v726
      %v728 = vpop.f32.mrb[0].mxu0
      %729 = vmatprep.mubr.bf16.mxu0 0
      %730 = vmatmul.mubr.bf16.gmra.mrb[0].mxu0 %v665
      %v731 = vpop.f32.mrb[0].mxu0
      %v732 = vadd.f32 0.0, %v731
      %v733 = vpop.f32.mrb[0].mxu0
      %v734 = vpop.f32.mrb[0].mxu0
      %v735 = vadd.f32 0.0, %v734
      %v736 = vpop.f32.mrb[0].mxu0
      %737 = vmatprep.mubr.bf16.mxu0 0
      %738 = vmatmul.mubr.bf16.gmra.mrb[0].mxu0 %v668
      %v739 = vpop.f32.mrb[0].mxu0
      %v740 = vadd.f32 0.0, %v739
      %v741 = vpop.f32.mrb[0].mxu0
      %v742 = vpop.f32.mrb[0].mxu0
      %v743 = vadd.f32 0.0, %v742
      %v744 = vpop.f32.mrb[0].mxu0
      %745 = vmatprep.mubr.bf16.mxu0 0
      %746 = vmatmul.mubr.bf16.gmra.mrb[0].mxu0 %v671
      %v747 = vpop.f32.mrb[0].mxu0
      %v748 = vadd.f32 0.0, %v747
      %v749 = vpop.f32.mrb[0].mxu0
      %v750 = vpop.f32.mrb[0].mxu0
      %v751 = vadd.f32 0.0, %v750
      %v752 = vpop.f32.mrb[0].mxu0
      %753 = vdwg.mxu0
      %v754 = vpack.c.bf16 %v743, %v740
      %v755 = vpack.c.bf16 %v751, %v748
      %756 = vset.pattern.permute.xlu0 2
      %757 = vperm.xlu0 %756, %v425
      %v758 = vpop.permute.xlu0 %757
      %760 = vset.pattern.permute.xlu0 2
      %761 = vperm.xlu0 %760, %v426
      %v762 = vpop.permute.xlu0 %761
      %764 = vset.pattern.permute.xlu0 2
      %765 = vperm.xlu0 %764, %v427
      %v766 = vpop.permute.xlu0 %765
      %768 = vset.pattern.permute.xlu0 2
      %769 = vperm.xlu0 %768, %v428
      %v770 = vpop.permute.xlu0 %769
      %v772 = vadd.f32 %v708, %v758
      %v773 = vadd.f32 %v711, %v762
      %v774 = vadd.f32 %v716, %v766
      %v775 = vadd.f32 %v719, %v770
      %v776 = vxor.u32 %v772, 2147483648
      %v777 = vxor.u32 %v773, 2147483648
      %v778 = vxor.u32 %v774, 2147483648
      %v779 = vxor.u32 %v775, 2147483648
      %v780 = vmul.f32 %v776, 1.442695
      %v781 = vpow.pop %v780
      %v782 = vmul.f32 %v777, 1.442695
      %v783 = vpow.pop %v782
      %v784 = vmul.f32 %v778, 1.442695
      %v785 = vpow.pop %v784
      %v786 = vmul.f32 %v779, 1.442695
      %v787 = vpow.pop %v786
      %v788 = vadd.f32 %v781, 1.0
      %v789 = vadd.f32 %v783, 1.0
      %v790 = vadd.f32 %v785, 1.0
      %v791 = vadd.f32 %v787, 1.0
      %v792 = vrcp.pop %v788
      %v793 = vmul.f32 1.0, %v792
      %v794 = vrcp.pop %v789
      %v795 = vmul.f32 1.0, %v794
      %v796 = vrcp.pop %v790
      %v797 = vmul.f32 1.0, %v796
      %v798 = vrcp.pop %v791
      %v799 = vmul.f32 1.0, %v798
      %800 = vset.pattern.permute.xlu0 3
      %801 = vperm.xlu0 %800, %v425
      %v802 = vpop.permute.xlu0 %801
      %804 = vset.pattern.permute.xlu0 3
      %805 = vperm.xlu0 %804, %v426
      %v806 = vpop.permute.xlu0 %805
      %808 = vset.pattern.permute.xlu0 3
      %809 = vperm.xlu0 %808, %v427
      %v810 = vpop.permute.xlu0 %809
      %812 = vset.pattern.permute.xlu0 3
      %813 = vperm.xlu0 %812, %v428
      %v814 = vpop.permute.xlu0 %813
      %v816 = vadd.f32 %v724, %v802
      %v817 = vadd.f32 %v727, %v806
      %v818 = vadd.f32 %v732, %v810
      %v819 = vadd.f32 %v735, %v814
      %v820 = vxor.u32 %v816, 2147483648
      %v821 = vxor.u32 %v817, 2147483648
      %v822 = vxor.u32 %v818, 2147483648
      %v823 = vxor.u32 %v819, 2147483648
      %v824 = vmul.f32 %v820, 1.442695
      %v825 = vpow.pop %v824
      %v826 = vmul.f32 %v821, 1.442695
      %v827 = vpow.pop %v826
      %v828 = vmul.f32 %v822, 1.442695
      %v829 = vpow.pop %v828
      %v830 = vmul.f32 %v823, 1.442695
      %v831 = vpow.pop %v830
      %v832 = vadd.f32 %v825, 1.0
      %v833 = vadd.f32 %v827, 1.0
      %v834 = vadd.f32 %v829, 1.0
      %v835 = vadd.f32 %v831, 1.0
      %v836 = vrcp.pop %v832
      %v837 = vmul.f32 1.0, %v836
      %v838 = vrcp.pop %v833
      %v839 = vmul.f32 1.0, %v838
      %v840 = vrcp.pop %v834
      %v841 = vmul.f32 1.0, %v840
      %v842 = vrcp.pop %v835
      %v843 = vmul.f32 1.0, %v842
      %v844 = vld [vmem:[%s5] sm:$0xf]
      %v845 = vld [vmem:[%s5 + $0x4] sm:$0xf]
      %v846 = vld [vmem:[%s5 + $0x8] sm:$0xf]
      %v847 = vld [vmem:[%s5 + $0xc] sm:$0xf]
      %v848 = vmul.f32 %v793, %v300
      %v849 = vmul.f32 %v795, %v301
      %v850 = vmul.f32 %v797, %v302
      %v851 = vmul.f32 %v799, %v303
      %v852 = vpack.c.bf16 %v849, %v848
      %v853 = vpack.c.bf16 %v851, %v850
      %v854 = vunpack.c.l.bf16 %v754
      %v855 = vunpack.c.h.bf16 %v754
      %v856 = vunpack.c.l.bf16 %v755
      %v857 = vunpack.c.h.bf16 %v755
      %v862 = vunpack.c.l.b16 %v844
      %v863 = vunpack.c.l.b16 %v845
      %v864 = vunpack.c.l.b16 %v846
      %v865 = vunpack.c.l.b16 %v847
      %v866 = vpack.c.b16 %v863, %v862
      %v867 = vpack.c.b16 %v865, %v864
      %v869 = vsel %vm459, %v866, 0
      %v872 = vsel %vm459, %v867, 0
      %874 = vmatprep.subr.bf16.mxu0 0
      %875 = vmatpush1.bf16.msra.mxu0 %v852
      %876 = vmatprep.subr.bf16.mxu0 0
      %877 = vmatpush1.bf16.msra.mxu0 %v853
      %878 = vmatprep.subr.bf16.mxu0 0
      %879 = vmatpush1.bf16.msra.mxu0 0
      %880 = vmatprep.subr.bf16.mxu0 0
      %881 = vmatpush1.bf16.msra.mxu0 0
      %882 = vmatprep.subr.bf16.mxu0 0
      %883 = vmatpush1.bf16.msra.mxu0 0
      %884 = vmatprep.subr.bf16.mxu0 0
      %885 = vmatpush1.bf16.msra.mxu0 0
      %886 = vmatprep.subr.bf16.mxu0 0
      %887 = vmatpush1.bf16.msra.mxu0 0
      %888 = vmatprep.subr.bf16.mxu0 0
      %889 = vmatpush1.bf16.msra.mxu0 0
      %890 = vmatprep.subr.bf16.mxu0 0
      %891 = vmatpush1.bf16.msra.mxu0 0
      %892 = vmatprep.subr.bf16.mxu0 0
      %893 = vmatpush1.bf16.msra.mxu0 0
      %894 = vmatprep.subr.bf16.mxu0 0
      %895 = vmatpush1.bf16.msra.mxu0 0
      %896 = vmatprep.subr.bf16.mxu0 0
      %897 = vmatpush1.bf16.msra.mxu0 0
      %898 = vmatprep.subr.bf16.mxu0 0
      %899 = vmatpush1.bf16.msra.mxu0 0
      %900 = vmatprep.subr.bf16.mxu0 0
      %901 = vmatpush1.bf16.msra.mxu0 0
      %902 = vmatprep.subr.bf16.mxu0 0
      %903 = vmatpush1.bf16.msra.mxu0 0
      %904 = vmatprep.subr.bf16.mxu0 0
      %905 = vmatpush1.bf16.msra.mxu0 0
      %906 = vmatprep.mubr.bf16.mxu0 0
      %907 = vmatmul.mubr.bf16.gmra.mrb[0].mxu0 %v869
      %v908 = vpop.f32.mrb[0].mxu0
      %v909 = vadd.f32 %v854, %v908
      %v910 = vpop.f32.mrb[0].mxu0
      %v911 = vpop.f32.mrb[0].mxu0
      %v912 = vadd.f32 %v855, %v911
      %v913 = vpop.f32.mrb[0].mxu0
      %914 = vmatprep.mubr.bf16.mxu0 0
      %915 = vmatmul.mubr.bf16.gmra.mrb[0].mxu0 %v872
      %v916 = vpop.f32.mrb[0].mxu0
      %v917 = vadd.f32 %v856, %v916
      %v918 = vpop.f32.mrb[0].mxu0
      %v919 = vpop.f32.mrb[0].mxu0
      %v920 = vadd.f32 %v857, %v919
      %v921 = vpop.f32.mrb[0].mxu0
      %922 = vdwg.mxu0
      %923 = vset.pattern.permute.xlu0 4
      %924 = vperm.xlu0 %923, %v425
      %v925 = vpop.permute.xlu0 %924
      %927 = vset.pattern.permute.xlu0 4
      %928 = vperm.xlu0 %927, %v426
      %v929 = vpop.permute.xlu0 %928
      %931 = vset.pattern.permute.xlu0 4
      %932 = vperm.xlu0 %931, %v427
      %v933 = vpop.permute.xlu0 %932
      %935 = vset.pattern.permute.xlu0 4
      %936 = vperm.xlu0 %935, %v428
      %v937 = vpop.permute.xlu0 %936
      %v939 = vadd.f32 %v909, %v925
      %v940 = vadd.f32 %v912, %v929
      %v941 = vadd.f32 %v917, %v933
      %v942 = vadd.f32 %v920, %v937
      %v943 = vtanh.pop %v939
      %v944 = vtanh.pop %v940
      %v945 = vtanh.pop %v941
      %v946 = vtanh.pop %v942
      %v947 = vsub.f32 %v300, %v943
      %v948 = vsub.f32 %v301, %v944
      %v949 = vsub.f32 %v302, %v945
      %v950 = vsub.f32 %v303, %v946
      %v951 = vmul.f32 %v837, %v947
      %v952 = vmul.f32 %v839, %v948
      %v953 = vmul.f32 %v841, %v949
      %v954 = vmul.f32 %v843, %v950
      %v955 = vadd.f32 %v943, %v951
      %v956 = vadd.f32 %v944, %v952
      %v957 = vadd.f32 %v945, %v953
      %v958 = vadd.f32 %v946, %v954
      %v959 = vtanh.pop %v955
      %v960 = vtanh.pop %v956
      %v961 = vtanh.pop %v957
      %v962 = vtanh.pop %v958
      %v963 = vpack.c.bf16 %v960, %v959
      %v964 = vpack.c.bf16 %v962, %v961
      %965 = vmatprep.subr.bf16.mxu0 0
      %966 = vmatpush1.bf16.msra.mxu0 %v354
      %967 = vmatprep.subr.bf16.mxu0 0
      %968 = vmatpush1.bf16.msra.mxu0 %v355
      %969 = vmatprep.subr.bf16.mxu0 0
      %970 = vmatpush1.bf16.msra.mxu0 %v356
      %971 = vmatprep.subr.bf16.mxu0 0
      %972 = vmatpush1.bf16.msra.mxu0 %v357
      %973 = vmatprep.subr.bf16.mxu0 0
      %974 = vmatpush1.bf16.msra.mxu0 %v358
      %975 = vmatprep.subr.bf16.mxu0 0
      %976 = vmatpush1.bf16.msra.mxu0 %v359
      %977 = vmatprep.subr.bf16.mxu0 0
      %978 = vmatpush1.bf16.msra.mxu0 %v360
      %979 = vmatprep.subr.bf16.mxu0 0
      %980 = vmatpush1.bf16.msra.mxu0 %v361
      %981 = vmatprep.subr.bf16.mxu0 0
      %982 = vmatpush1.bf16.msra.mxu0 0
      %983 = vmatprep.subr.bf16.mxu0 0
      %984 = vmatpush1.bf16.msra.mxu0 0
      %985 = vmatprep.subr.bf16.mxu0 0
      %986 = vmatpush1.bf16.msra.mxu0 0
      %987 = vmatprep.subr.bf16.mxu0 0
      %988 = vmatpush1.bf16.msra.mxu0 0
      %989 = vmatprep.subr.bf16.mxu0 0
      %990 = vmatpush1.bf16.msra.mxu0 0
      %991 = vmatprep.subr.bf16.mxu0 0
      %992 = vmatpush1.bf16.msra.mxu0 0
      %993 = vmatprep.subr.bf16.mxu0 0
      %994 = vmatpush1.bf16.msra.mxu0 0
      %995 = vmatprep.subr.bf16.mxu0 0
      %996 = vmatpush1.bf16.msra.mxu0 0
      %997 = vmatprep.mubr.bf16.mxu0 0
      %998 = vmatmul.mubr.bf16.gmra.mrb[0].mxu0 %v963
      %v999 = vpop.f32.mrb[0].mxu0
      %v1000 = vadd.f32 0.0, %v999
      %v1001 = vpop.f32.mrb[0].mxu0
      %v1002 = vpop.f32.mrb[0].mxu0
      %v1003 = vadd.f32 0.0, %v1002
      %v1004 = vpop.f32.mrb[0].mxu0
      %1005 = vmatprep.mubr.bf16.mxu0 0
      %1006 = vmatmul.mubr.bf16.gmra.mrb[0].mxu0 %v964
      %v1007 = vpop.f32.mrb[0].mxu0
      %v1008 = vadd.f32 0.0, %v1007
      %v1009 = vpop.f32.mrb[0].mxu0
      %v1010 = vpop.f32.mrb[0].mxu0
      %v1011 = vadd.f32 0.0, %v1010
      %v1012 = vpop.f32.mrb[0].mxu0
      %1013 = vdwg.mxu0
      %v1014 = vpack.c.bf16 %v1003, %v1000
      %v1015 = vpack.c.bf16 %v1011, %v1008
      %1016 = vmatprep.subr.bf16.mxu0 0
      %1017 = vmatpush1.bf16.msra.mxu0 %v1014
      %1018 = vmatprep.subr.bf16.mxu0 0
      %1019 = vmatpush1.bf16.msra.mxu0 %v1015
      %1020 = vmatprep.subr.bf16.mxu0 0
      %1021 = vmatpush1.bf16.msra.mxu0 0
      %1022 = vmatprep.subr.bf16.mxu0 0
      %1023 = vmatpush1.bf16.msra.mxu0 0
      %1024 = vmatprep.subr.bf16.mxu0 0
      %1025 = vmatpush1.bf16.msra.mxu0 0
      %1026 = vmatprep.subr.bf16.mxu0 0
      %1027 = vmatpush1.bf16.msra.mxu0 0
      %1028 = vmatprep.subr.bf16.mxu0 0
      %1029 = vmatpush1.bf16.msra.mxu0 0
      %1030 = vmatprep.subr.bf16.mxu0 0
      %1031 = vmatpush1.bf16.msra.mxu0 0
      %1032 = vmatprep.subr.bf16.mxu0 0
      %1033 = vmatpush1.bf16.msra.mxu0 0
      %1034 = vmatprep.subr.bf16.mxu0 0
      %1035 = vmatpush1.bf16.msra.mxu0 0
      %1036 = vmatprep.subr.bf16.mxu0 0
      %1037 = vmatpush1.bf16.msra.mxu0 0
      %1038 = vmatprep.subr.bf16.mxu0 0
      %1039 = vmatpush1.bf16.msra.mxu0 0
      %1040 = vmatprep.subr.bf16.mxu0 0
      %1041 = vmatpush1.bf16.msra.mxu0 0
      %1042 = vmatprep.subr.bf16.mxu0 0
      %1043 = vmatpush1.bf16.msra.mxu0 0
      %1044 = vmatprep.subr.bf16.mxu0 0
      %1045 = vmatpush1.bf16.msra.mxu0 0
      %1046 = vmatprep.subr.bf16.mxu0 0
      %1047 = vmatpush1.bf16.msra.mxu0 0
      %1048 = vmatprep.mubr.bf16.mxu0 0
      %1049 = vmatmul.mubr.bf16.gmra.mrb[0].mxu0 %v461
      %v1050 = vpop.f32.mrb[0].mxu0
      %v1051 = vadd.f32 %v432, %v1050
      %v1052 = vpop.f32.mrb[0].mxu0
      %v1053 = vpop.f32.mrb[0].mxu0
      %v1054 = vadd.f32 %v437, %v1053
      %v1055 = vpop.f32.mrb[0].mxu0
      %1056 = vmatprep.mubr.bf16.mxu0 0
      %1057 = vmatmul.mubr.bf16.gmra.mrb[0].mxu0 %v464
      %v1058 = vpop.f32.mrb[0].mxu0
      %v1059 = vadd.f32 %v442, %v1058
      %v1060 = vpop.f32.mrb[0].mxu0
      %v1061 = vpop.f32.mrb[0].mxu0
      %v1062 = vadd.f32 %v447, %v1061
      %v1063 = vpop.f32.mrb[0].mxu0
      %1064 = vdwg.mxu0
      %v1065 = vmax.f32 %v1051, 0.0
      %v1066 = vmax.f32 %v1054, 0.0
      %v1067 = vmax.f32 %v1059, 0.0
      %v1068 = vmax.f32 %v1062, 0.0
      %v1069 = vpack.c.bf16 %v1066, %v1065
      %v1070 = vpack.c.bf16 %v1068, %v1067
      %1071 = vmatprep.subr.bf16.mxu0 0
      %1072 = vmatpush1.bf16.msra.mxu0 %v1069
      %1073 = vmatprep.subr.bf16.mxu0 0
      %1074 = vmatpush1.bf16.msra.mxu0 %v1070
      %1075 = vmatprep.subr.bf16.mxu0 0
      %1076 = vmatpush1.bf16.msra.mxu0 0
      %1077 = vmatprep.subr.bf16.mxu0 0
      %1078 = vmatpush1.bf16.msra.mxu0 0
      %1079 = vmatprep.subr.bf16.mxu0 0
      %1080 = vmatpush1.bf16.msra.mxu0 0
      %1081 = vmatprep.subr.bf16.mxu0 0
      %1082 = vmatpush1.bf16.msra.mxu0 0
      %1083 = vmatprep.subr.bf16.mxu0 0
      %1084 = vmatpush1.bf16.msra.mxu0 0
      %1085 = vmatprep.subr.bf16.mxu0 0
      %1086 = vmatpush1.bf16.msra.mxu0 0
      %1087 = vmatprep.subr.bf16.mxu0 0
      %1088 = vmatpush1.bf16.msra.mxu0 0
      %1089 = vmatprep.subr.bf16.mxu0 0
      %1090 = vmatpush1.bf16.msra.mxu0 0
      %1091 = vmatprep.subr.bf16.mxu0 0
      %1092 = vmatpush1.bf16.msra.mxu0 0
      %1093 = vmatprep.subr.bf16.mxu0 0
      %1094 = vmatpush1.bf16.msra.mxu0 0
      %1095 = vmatprep.subr.bf16.mxu0 0
      %1096 = vmatpush1.bf16.msra.mxu0 0
      %1097 = vmatprep.subr.bf16.mxu0 0
      %1098 = vmatpush1.bf16.msra.mxu0 0
      %1099 = vmatprep.subr.bf16.mxu0 0
      %1100 = vmatpush1.bf16.msra.mxu0 0
      %1101 = vmatprep.subr.bf16.mxu0 0
      %1102 = vmatpush1.bf16.msra.mxu0 0
      %1103 = vmatprep.mubr.bf16.mxu0 0
      %1104 = vmatmul.mubr.bf16.gmra.mrb[0].mxu0 %v552
      %v1105 = vpop.f32.mrb[0].mxu0
      %v1106 = vadd.f32 %v527, %v1105
      %v1107 = vpop.f32.mrb[0].mxu0
      %v1108 = vpop.f32.mrb[0].mxu0
      %v1109 = vadd.f32 %v531, %v1108
      %v1110 = vpop.f32.mrb[0].mxu0
      %1111 = vmatprep.mubr.bf16.mxu0 0
      %1112 = vmatmul.mubr.bf16.gmra.mrb[0].mxu0 %v555
      %v1113 = vpop.f32.mrb[0].mxu0
      %v1114 = vadd.f32 %v535, %v1113
      %v1115 = vpop.f32.mrb[0].mxu0
      %v1116 = vpop.f32.mrb[0].mxu0
      %v1117 = vadd.f32 %v539, %v1116
      %v1118 = vpop.f32.mrb[0].mxu0
      %1119 = vdwg.mxu0
      %v1120 = vtanh.pop %v1106
      %v1121 = vtanh.pop %v1109
      %v1122 = vtanh.pop %v1114
      %v1123 = vtanh.pop %v1117
      %v1124 = vpack.c.bf16 %v1121, %v1120
      %v1125 = vpack.c.bf16 %v1123, %v1122
      %1126 = vmatprep.subr.bf16.mxu0 0
      %1127 = vmatpush1.bf16.msra.mxu0 %v963
      %1128 = vmatprep.subr.bf16.mxu0 0
      %1129 = vmatpush1.bf16.msra.mxu0 %v964
      %1130 = vmatprep.subr.bf16.mxu0 0
      %1131 = vmatpush1.bf16.msra.mxu0 %v1124
      %1132 = vmatprep.subr.bf16.mxu0 0
      %1133 = vmatpush1.bf16.msra.mxu0 %v1125
      %1134 = vmatprep.subr.bf16.mxu0 0
      %1135 = vmatpush1.bf16.msra.mxu0 0
      %1136 = vmatprep.subr.bf16.mxu0 0
      %1137 = vmatpush1.bf16.msra.mxu0 0
      %1138 = vmatprep.subr.bf16.mxu0 0
      %1139 = vmatpush1.bf16.msra.mxu0 0
      %1140 = vmatprep.subr.bf16.mxu0 0
      %1141 = vmatpush1.bf16.msra.mxu0 0
      %1142 = vmatprep.subr.bf16.mxu0 0
      %1143 = vmatpush1.bf16.msra.mxu0 0
      %1144 = vmatprep.subr.bf16.mxu0 0
      %1145 = vmatpush1.bf16.msra.mxu0 0
      %1146 = vmatprep.subr.bf16.mxu0 0
      %1147 = vmatpush1.bf16.msra.mxu0 0
      %1148 = vmatprep.subr.bf16.mxu0 0
      %1149 = vmatpush1.bf16.msra.mxu0 0
      %1150 = vmatprep.subr.bf16.mxu0 0
      %1151 = vmatpush1.bf16.msra.mxu0 0
      %1152 = vmatprep.subr.bf16.mxu0 0
      %1153 = vmatpush1.bf16.msra.mxu0 0
      %1154 = vmatprep.subr.bf16.mxu0 0
      %1155 = vmatpush1.bf16.msra.mxu0 0
      %1156 = vmatprep.subr.bf16.mxu0 0
      %1157 = vmatpush1.bf16.msra.mxu0 0
      %1158 = vmatprep.mubr.bf16.mxu0 0
      %1159 = vmatmul.mubr.bf16.gmra.mrb[0].mxu0 %v656
      %v1160 = vpop.f32.mrb[0].mxu0
      %v1161 = vadd.f32 0.0, %v1160
      %v1162 = vpop.f32.mrb[0].mxu0
      %v1163 = vpop.f32.mrb[0].mxu0
      %v1164 = vadd.f32 0.0, %v1163
      %v1165 = vpop.f32.mrb[0].mxu0
      %1166 = vmatprep.mubr.bf16.mxu0 0
      %1167 = vmatmul.mubr.bf16.gmra.mrb[0].mxu0 %v659
      %v1168 = vpop.f32.mrb[0].mxu0
      %v1169 = vadd.f32 0.0, %v1168
      %v1170 = vpop.f32.mrb[0].mxu0
      %v1171 = vpop.f32.mrb[0].mxu0
      %v1172 = vadd.f32 0.0, %v1171
      %v1173 = vpop.f32.mrb[0].mxu0
      %1174 = vmatprep.mubr.bf16.mxu0 0
      %1175 = vmatmul.mubr.bf16.gmra.mrb[0].mxu0 %v662
      %v1176 = vpop.f32.mrb[0].mxu0
      %v1177 = vadd.f32 0.0, %v1176
      %v1178 = vpop.f32.mrb[0].mxu0
      %v1179 = vpop.f32.mrb[0].mxu0
      %v1180 = vadd.f32 0.0, %v1179
      %v1181 = vpop.f32.mrb[0].mxu0
      %1182 = vmatprep.mubr.bf16.mxu0 0
      %1183 = vmatmul.mubr.bf16.gmra.mrb[0].mxu0 %v665
      %v1184 = vpop.f32.mrb[0].mxu0
      %v1185 = vadd.f32 0.0, %v1184
      %v1186 = vpop.f32.mrb[0].mxu0
      %v1187 = vpop.f32.mrb[0].mxu0
      %v1188 = vadd.f32 0.0, %v1187
      %v1189 = vpop.f32.mrb[0].mxu0
      %1190 = vmatprep.mubr.bf16.mxu0 0
      %1191 = vmatmul.mubr.bf16.gmra.mrb[0].mxu0 %v668
      %v1192 = vpop.f32.mrb[0].mxu0
      %v1193 = vadd.f32 0.0, %v1192
      %v1194 = vpop.f32.mrb[0].mxu0
      %v1195 = vpop.f32.mrb[0].mxu0
      %v1196 = vadd.f32 0.0, %v1195
      %v1197 = vpop.f32.mrb[0].mxu0
      %1198 = vmatprep.mubr.bf16.mxu0 0
      %1199 = vmatmul.mubr.bf16.gmra.mrb[0].mxu0 %v671
      %v1200 = vpop.f32.mrb[0].mxu0
      %v1201 = vadd.f32 0.0, %v1200
      %v1202 = vpop.f32.mrb[0].mxu0
      %v1203 = vpop.f32.mrb[0].mxu0
      %v1204 = vadd.f32 0.0, %v1203
      %v1205 = vpop.f32.mrb[0].mxu0
      %1206 = vdwg.mxu0
      %v1207 = vpack.c.bf16 %v1196, %v1193
      %v1208 = vpack.c.bf16 %v1204, %v1201
      %v1209 = vadd.f32 %v1161, %v758
      %v1210 = vadd.f32 %v1164, %v762
      %v1211 = vadd.f32 %v1169, %v766
      %v1212 = vadd.f32 %v1172, %v770
      %v1213 = vxor.u32 %v1209, 2147483648
      %v1214 = vxor.u32 %v1210, 2147483648
      %v1215 = vxor.u32 %v1211, 2147483648
      %v1216 = vxor.u32 %v1212, 2147483648
      %v1217 = vmul.f32 %v1213, 1.442695
      %v1218 = vpow.pop %v1217
      %v1219 = vmul.f32 %v1214, 1.442695
      %v1220 = vpow.pop %v1219
      %v1221 = vmul.f32 %v1215, 1.442695
      %v1222 = vpow.pop %v1221
      %v1223 = vmul.f32 %v1216, 1.442695
      %v1224 = vpow.pop %v1223
      %v1225 = vadd.f32 %v1218, 1.0
      %v1226 = vadd.f32 %v1220, 1.0
      %v1227 = vadd.f32 %v1222, 1.0
      %v1228 = vadd.f32 %v1224, 1.0
      %v1229 = vrcp.pop %v1225
      %v1230 = vmul.f32 1.0, %v1229
      %v1231 = vrcp.pop %v1226
      %v1232 = vmul.f32 1.0, %v1231
      %v1233 = vrcp.pop %v1227
      %v1234 = vmul.f32 1.0, %v1233
      %v1235 = vrcp.pop %v1228
      %v1236 = vmul.f32 1.0, %v1235
      %v1237 = vadd.f32 %v1177, %v802
      %v1238 = vadd.f32 %v1180, %v806
      %v1239 = vadd.f32 %v1185, %v810
      %v1240 = vadd.f32 %v1188, %v814
      %v1241 = vxor.u32 %v1237, 2147483648
      %v1242 = vxor.u32 %v1238, 2147483648
      %v1243 = vxor.u32 %v1239, 2147483648
      %v1244 = vxor.u32 %v1240, 2147483648
      %v1245 = vmul.f32 %v1241, 1.442695
      %v1246 = vpow.pop %v1245
      %v1247 = vmul.f32 %v1242, 1.442695
      %v1248 = vpow.pop %v1247
      %v1249 = vmul.f32 %v1243, 1.442695
      %v1250 = vpow.pop %v1249
      %v1251 = vmul.f32 %v1244, 1.442695
      %v1252 = vpow.pop %v1251
      %v1253 = vadd.f32 %v1246, 1.0
      %v1254 = vadd.f32 %v1248, 1.0
      %v1255 = vadd.f32 %v1250, 1.0
      %v1256 = vadd.f32 %v1252, 1.0
      %v1257 = vrcp.pop %v1253
      %v1258 = vmul.f32 1.0, %v1257
      %v1259 = vrcp.pop %v1254
      %v1260 = vmul.f32 1.0, %v1259
      %v1261 = vrcp.pop %v1255
      %v1262 = vmul.f32 1.0, %v1261
      %v1263 = vrcp.pop %v1256
      %v1264 = vmul.f32 1.0, %v1263
      %v1265 = vmul.f32 %v1230, %v959
      %v1266 = vmul.f32 %v1232, %v960
      %v1267 = vmul.f32 %v1234, %v961
      %v1268 = vmul.f32 %v1236, %v962
      %v1269 = vpack.c.bf16 %v1266, %v1265
      %v1270 = vpack.c.bf16 %v1268, %v1267
      %v1271 = vunpack.c.l.bf16 %v1207
      %v1272 = vunpack.c.h.bf16 %v1207
      %v1273 = vunpack.c.l.bf16 %v1208
      %v1274 = vunpack.c.h.bf16 %v1208
      %1275 = vmatprep.subr.bf16.mxu0 0
      %1276 = vmatpush1.bf16.msra.mxu0 %v1269
      %1277 = vmatprep.subr.bf16.mxu0 0
      %1278 = vmatpush1.bf16.msra.mxu0 %v1270
      %1279 = vmatprep.subr.bf16.mxu0 0
      %1280 = vmatpush1.bf16.msra.mxu0 0
      %1281 = vmatprep.subr.bf16.mxu0 0
      %1282 = vmatpush1.bf16.msra.mxu0 0
      %1283 = vmatprep.subr.bf16.mxu0 0
      %1284 = vmatpush1.bf16.msra.mxu0 0
      %1285 = vmatprep.subr.bf16.mxu0 0
      %1286 = vmatpush1.bf16.msra.mxu0 0
      %1287 = vmatprep.subr.bf16.mxu0 0
      %1288 = vmatpush1.bf16.msra.mxu0 0
      %1289 = vmatprep.subr.bf16.mxu0 0
      %1290 = vmatpush1.bf16.msra.mxu0 0
      %1291 = vmatprep.subr.bf16.mxu0 0
      %1292 = vmatpush1.bf16.msra.mxu0 0
      %1293 = vmatprep.subr.bf16.mxu0 0
      %1294 = vmatpush1.bf16.msra.mxu0 0
      %1295 = vmatprep.subr.bf16.mxu0 0
      %1296 = vmatpush1.bf16.msra.mxu0 0
      %1297 = vmatprep.subr.bf16.mxu0 0
      %1298 = vmatpush1.bf16.msra.mxu0 0
      %1299 = vmatprep.subr.bf16.mxu0 0
      %1300 = vmatpush1.bf16.msra.mxu0 0
      %1301 = vmatprep.subr.bf16.mxu0 0
      %1302 = vmatpush1.bf16.msra.mxu0 0
      %1303 = vmatprep.subr.bf16.mxu0 0
      %1304 = vmatpush1.bf16.msra.mxu0 0
      %1305 = vmatprep.subr.bf16.mxu0 0
      %1306 = vmatpush1.bf16.msra.mxu0 0
      %1307 = vmatprep.mubr.bf16.mxu0 0
      %1308 = vmatmul.mubr.bf16.gmra.mrb[0].mxu0 %v869
      %v1309 = vpop.f32.mrb[0].mxu0
      %v1310 = vadd.f32 %v1271, %v1309
      %v1311 = vpop.f32.mrb[0].mxu0
      %v1312 = vpop.f32.mrb[0].mxu0
      %v1313 = vadd.f32 %v1272, %v1312
      %v1314 = vpop.f32.mrb[0].mxu0
      %1315 = vmatprep.mubr.bf16.mxu0 0
      %1316 = vmatmul.mubr.bf16.gmra.mrb[0].mxu0 %v872
      %v1317 = vpop.f32.mrb[0].mxu0
      %v1318 = vadd.f32 %v1273, %v1317
      %v1319 = vpop.f32.mrb[0].mxu0
      %v1320 = vpop.f32.mrb[0].mxu0
      %v1321 = vadd.f32 %v1274, %v1320
      %v1322 = vpop.f32.mrb[0].mxu0
      %1323 = vdwg.mxu0
      %v1324 = vadd.f32 %v1310, %v925
      %v1325 = vadd.f32 %v1313, %v929
      %v1326 = vadd.f32 %v1318, %v933
      %v1327 = vadd.f32 %v1321, %v937
      %v1328 = vtanh.pop %v1324
      %v1329 = vtanh.pop %v1325
      %v1330 = vtanh.pop %v1326
      %v1331 = vtanh.pop %v1327
      %v1332 = vsub.f32 %v959, %v1328
      %v1333 = vsub.f32 %v960, %v1329
      %v1334 = vsub.f32 %v961, %v1330
      %v1335 = vsub.f32 %v962, %v1331
      %v1336 = vmul.f32 %v1258, %v1332
      %v1337 = vmul.f32 %v1260, %v1333
      %v1338 = vmul.f32 %v1262, %v1334
      %v1339 = vmul.f32 %v1264, %v1335
      %v1340 = vadd.f32 %v1328, %v1336
      %v1341 = vadd.f32 %v1329, %v1337
      %v1342 = vadd.f32 %v1330, %v1338
      %v1343 = vadd.f32 %v1331, %v1339
      %v1344 = vtanh.pop %v1340
      %v1345 = vtanh.pop %v1341
      %v1346 = vtanh.pop %v1342
      %v1347 = vtanh.pop %v1343
      %v1348 = vpack.c.bf16 %v1345, %v1344
      %v1349 = vpack.c.bf16 %v1347, %v1346
      %1350 = vmatprep.subr.bf16.mxu0 0
      %1351 = vmatpush1.bf16.msra.mxu0 %v354
      %1352 = vmatprep.subr.bf16.mxu0 0
      %1353 = vmatpush1.bf16.msra.mxu0 %v355
      %1354 = vmatprep.subr.bf16.mxu0 0
      %1355 = vmatpush1.bf16.msra.mxu0 %v356
      %1356 = vmatprep.subr.bf16.mxu0 0
      %1357 = vmatpush1.bf16.msra.mxu0 %v357
      %1358 = vmatprep.subr.bf16.mxu0 0
      %1359 = vmatpush1.bf16.msra.mxu0 %v358
      %1360 = vmatprep.subr.bf16.mxu0 0
      %1361 = vmatpush1.bf16.msra.mxu0 %v359
      %1362 = vmatprep.subr.bf16.mxu0 0
      %1363 = vmatpush1.bf16.msra.mxu0 %v360
      %1364 = vmatprep.subr.bf16.mxu0 0
      %1365 = vmatpush1.bf16.msra.mxu0 %v361
      %1366 = vmatprep.subr.bf16.mxu0 0
      %1367 = vmatpush1.bf16.msra.mxu0 0
      %1368 = vmatprep.subr.bf16.mxu0 0
      %1369 = vmatpush1.bf16.msra.mxu0 0
      %1370 = vmatprep.subr.bf16.mxu0 0
      %1371 = vmatpush1.bf16.msra.mxu0 0
      %1372 = vmatprep.subr.bf16.mxu0 0
      %1373 = vmatpush1.bf16.msra.mxu0 0
      %1374 = vmatprep.subr.bf16.mxu0 0
      %1375 = vmatpush1.bf16.msra.mxu0 0
      %1376 = vmatprep.subr.bf16.mxu0 0
      %1377 = vmatpush1.bf16.msra.mxu0 0
      %1378 = vmatprep.subr.bf16.mxu0 0
      %1379 = vmatpush1.bf16.msra.mxu0 0
      %1380 = vmatprep.subr.bf16.mxu0 0
      %1381 = vmatpush1.bf16.msra.mxu0 0
      %1382 = vmatprep.mubr.bf16.mxu0 0
      %1383 = vmatmul.mubr.bf16.gmra.mrb[0].mxu0 %v1348
      %v1384 = vpop.f32.mrb[0].mxu0
      %v1385 = vadd.f32 0.0, %v1384
      %v1386 = vpop.f32.mrb[0].mxu0
      %v1387 = vpop.f32.mrb[0].mxu0
      %v1388 = vadd.f32 0.0, %v1387
      %v1389 = vpop.f32.mrb[0].mxu0
      %1390 = vmatprep.mubr.bf16.mxu0 0
      %1391 = vmatmul.mubr.bf16.gmra.mrb[0].mxu0 %v1349
      %v1392 = vpop.f32.mrb[0].mxu0
      %v1393 = vadd.f32 0.0, %v1392
      %v1394 = vpop.f32.mrb[0].mxu0
      %v1395 = vpop.f32.mrb[0].mxu0
      %v1396 = vadd.f32 0.0, %v1395
      %v1397 = vpop.f32.mrb[0].mxu0
      %1398 = vdwg.mxu0
      %v1399 = vpack.c.bf16 %v1388, %v1385
      %v1400 = vpack.c.bf16 %v1396, %v1393
      %1401 = vmatprep.subr.bf16.mxu0 0
      %1402 = vmatpush1.bf16.msra.mxu0 %v1399
      %1403 = vmatprep.subr.bf16.mxu0 0
      %1404 = vmatpush1.bf16.msra.mxu0 %v1400
      %1405 = vmatprep.subr.bf16.mxu0 0
      %1406 = vmatpush1.bf16.msra.mxu0 0
      %1407 = vmatprep.subr.bf16.mxu0 0
      %1408 = vmatpush1.bf16.msra.mxu0 0
      %1409 = vmatprep.subr.bf16.mxu0 0
      %1410 = vmatpush1.bf16.msra.mxu0 0
      %1411 = vmatprep.subr.bf16.mxu0 0
      %1412 = vmatpush1.bf16.msra.mxu0 0
      %1413 = vmatprep.subr.bf16.mxu0 0
      %1414 = vmatpush1.bf16.msra.mxu0 0
      %1415 = vmatprep.subr.bf16.mxu0 0
      %1416 = vmatpush1.bf16.msra.mxu0 0
      %1417 = vmatprep.subr.bf16.mxu0 0
      %1418 = vmatpush1.bf16.msra.mxu0 0
      %1419 = vmatprep.subr.bf16.mxu0 0
      %1420 = vmatpush1.bf16.msra.mxu0 0
      %1421 = vmatprep.subr.bf16.mxu0 0
      %1422 = vmatpush1.bf16.msra.mxu0 0
      %1423 = vmatprep.subr.bf16.mxu0 0
      %1424 = vmatpush1.bf16.msra.mxu0 0
      %1425 = vmatprep.subr.bf16.mxu0 0
      %1426 = vmatpush1.bf16.msra.mxu0 0
      %1427 = vmatprep.subr.bf16.mxu0 0
      %1428 = vmatpush1.bf16.msra.mxu0 0
      %1429 = vmatprep.subr.bf16.mxu0 0
      %1430 = vmatpush1.bf16.msra.mxu0 0
      %1431 = vmatprep.subr.bf16.mxu0 0
      %1432 = vmatpush1.bf16.msra.mxu0 0
      %1433 = vmatprep.mubr.bf16.mxu0 0
      %1434 = vmatmul.mubr.bf16.gmra.mrb[0].mxu0 %v461
      %v1435 = vpop.f32.mrb[0].mxu0
      %v1436 = vadd.f32 %v432, %v1435
      %v1437 = vpop.f32.mrb[0].mxu0
      %v1438 = vpop.f32.mrb[0].mxu0
      %v1439 = vadd.f32 %v437, %v1438
      %v1440 = vpop.f32.mrb[0].mxu0
      %1441 = vmatprep.mubr.bf16.mxu0 0
      %1442 = vmatmul.mubr.bf16.gmra.mrb[0].mxu0 %v464
      %v1443 = vpop.f32.mrb[0].mxu0
      %v1444 = vadd.f32 %v442, %v1443
      %v1445 = vpop.f32.mrb[0].mxu0
      %v1446 = vpop.f32.mrb[0].mxu0
      %v1447 = vadd.f32 %v447, %v1446
      %v1448 = vpop.f32.mrb[0].mxu0
      %1449 = vdwg.mxu0
      %v1450 = vmax.f32 %v1436, 0.0
      %v1451 = vmax.f32 %v1439, 0.0
      %v1452 = vmax.f32 %v1444, 0.0
      %v1453 = vmax.f32 %v1447, 0.0
      %v1454 = vpack.c.bf16 %v1451, %v1450
      %v1455 = vpack.c.bf16 %v1453, %v1452
      %1456 = vmatprep.subr.bf16.mxu0 0
      %1457 = vmatpush1.bf16.msra.mxu0 %v1454
      %1458 = vmatprep.subr.bf16.mxu0 0
      %1459 = vmatpush1.bf16.msra.mxu0 %v1455
      %1460 = vmatprep.subr.bf16.mxu0 0
      %1461 = vmatpush1.bf16.msra.mxu0 0
      %1462 = vmatprep.subr.bf16.mxu0 0
      %1463 = vmatpush1.bf16.msra.mxu0 0
      %1464 = vmatprep.subr.bf16.mxu0 0
      %1465 = vmatpush1.bf16.msra.mxu0 0
      %1466 = vmatprep.subr.bf16.mxu0 0
      %1467 = vmatpush1.bf16.msra.mxu0 0
      %1468 = vmatprep.subr.bf16.mxu0 0
      %1469 = vmatpush1.bf16.msra.mxu0 0
      %1470 = vmatprep.subr.bf16.mxu0 0
      %1471 = vmatpush1.bf16.msra.mxu0 0
      %1472 = vmatprep.subr.bf16.mxu0 0
      %1473 = vmatpush1.bf16.msra.mxu0 0
      %1474 = vmatprep.subr.bf16.mxu0 0
      %1475 = vmatpush1.bf16.msra.mxu0 0
      %1476 = vmatprep.subr.bf16.mxu0 0
      %1477 = vmatpush1.bf16.msra.mxu0 0
      %1478 = vmatprep.subr.bf16.mxu0 0
      %1479 = vmatpush1.bf16.msra.mxu0 0
      %1480 = vmatprep.subr.bf16.mxu0 0
      %1481 = vmatpush1.bf16.msra.mxu0 0
      %1482 = vmatprep.subr.bf16.mxu0 0
      %1483 = vmatpush1.bf16.msra.mxu0 0
      %1484 = vmatprep.subr.bf16.mxu0 0
      %1485 = vmatpush1.bf16.msra.mxu0 0
      %1486 = vmatprep.subr.bf16.mxu0 0
      %1487 = vmatpush1.bf16.msra.mxu0 0
      %1488 = vmatprep.mubr.bf16.mxu0 0
      %1489 = vmatmul.mubr.bf16.gmra.mrb[0].mxu0 %v552
      %v1490 = vpop.f32.mrb[0].mxu0
      %v1491 = vadd.f32 %v527, %v1490
      %v1492 = vpop.f32.mrb[0].mxu0
      %v1493 = vpop.f32.mrb[0].mxu0
      %v1494 = vadd.f32 %v531, %v1493
      %v1495 = vpop.f32.mrb[0].mxu0
      %1496 = vmatprep.mubr.bf16.mxu0 0
      %1497 = vmatmul.mubr.bf16.gmra.mrb[0].mxu0 %v555
      %v1498 = vpop.f32.mrb[0].mxu0
      %v1499 = vadd.f32 %v535, %v1498
      %v1500 = vpop.f32.mrb[0].mxu0
      %v1501 = vpop.f32.mrb[0].mxu0
      %v1502 = vadd.f32 %v539, %v1501
      %v1503 = vpop.f32.mrb[0].mxu0
      %1504 = vdwg.mxu0
      %v1505 = vtanh.pop %v1491
      %v1506 = vtanh.pop %v1494
      %v1507 = vtanh.pop %v1499
      %v1508 = vtanh.pop %v1502
      %v1509 = vpack.c.bf16 %v1506, %v1505
      %v1510 = vpack.c.bf16 %v1508, %v1507
      %1511 = vmatprep.subr.bf16.mxu0 0
      %1512 = vmatpush1.bf16.msra.mxu0 %v1348
      %1513 = vmatprep.subr.bf16.mxu0 0
      %1514 = vmatpush1.bf16.msra.mxu0 %v1349
      %1515 = vmatprep.subr.bf16.mxu0 0
      %1516 = vmatpush1.bf16.msra.mxu0 %v1509
      %1517 = vmatprep.subr.bf16.mxu0 0
      %1518 = vmatpush1.bf16.msra.mxu0 %v1510
      %1519 = vmatprep.subr.bf16.mxu0 0
      %1520 = vmatpush1.bf16.msra.mxu0 0
      %1521 = vmatprep.subr.bf16.mxu0 0
      %1522 = vmatpush1.bf16.msra.mxu0 0
      %1523 = vmatprep.subr.bf16.mxu0 0
      %1524 = vmatpush1.bf16.msra.mxu0 0
      %1525 = vmatprep.subr.bf16.mxu0 0
      %1526 = vmatpush1.bf16.msra.mxu0 0
      %1527 = vmatprep.subr.bf16.mxu0 0
      %1528 = vmatpush1.bf16.msra.mxu0 0
      %1529 = vmatprep.subr.bf16.mxu0 0
      %1530 = vmatpush1.bf16.msra.mxu0 0
      %1531 = vmatprep.subr.bf16.mxu0 0
      %1532 = vmatpush1.bf16.msra.mxu0 0
      %1533 = vmatprep.subr.bf16.mxu0 0
      %1534 = vmatpush1.bf16.msra.mxu0 0
      %1535 = vmatprep.subr.bf16.mxu0 0
      %1536 = vmatpush1.bf16.msra.mxu0 0
      %1537 = vmatprep.subr.bf16.mxu0 0
      %1538 = vmatpush1.bf16.msra.mxu0 0
      %1539 = vmatprep.subr.bf16.mxu0 0
      %1540 = vmatpush1.bf16.msra.mxu0 0
      %1541 = vmatprep.subr.bf16.mxu0 0
      %1542 = vmatpush1.bf16.msra.mxu0 0
      %1543 = vmatprep.mubr.bf16.mxu0 0
      %1544 = vmatmul.mubr.bf16.gmra.mrb[0].mxu0 %v656
      %v1545 = vpop.f32.mrb[0].mxu0
      %v1546 = vadd.f32 0.0, %v1545
      %v1547 = vpop.f32.mrb[0].mxu0
      %v1548 = vpop.f32.mrb[0].mxu0
      %v1549 = vadd.f32 0.0, %v1548
      %v1550 = vpop.f32.mrb[0].mxu0
      %1551 = vmatprep.mubr.bf16.mxu0 0
      %1552 = vmatmul.mubr.bf16.gmra.mrb[0].mxu0 %v659
      %v1553 = vpop.f32.mrb[0].mxu0
      %v1554 = vadd.f32 0.0, %v1553
      %v1555 = vpop.f32.mrb[0].mxu0
      %v1556 = vpop.f32.mrb[0].mxu0
      %v1557 = vadd.f32 0.0, %v1556
      %v1558 = vpop.f32.mrb[0].mxu0
      %1559 = vmatprep.mubr.bf16.mxu0 0
      %1560 = vmatmul.mubr.bf16.gmra.mrb[0].mxu0 %v662
      %v1561 = vpop.f32.mrb[0].mxu0
      %v1562 = vadd.f32 0.0, %v1561
      %v1563 = vpop.f32.mrb[0].mxu0
      %v1564 = vpop.f32.mrb[0].mxu0
      %v1565 = vadd.f32 0.0, %v1564
      %v1566 = vpop.f32.mrb[0].mxu0
      %1567 = vmatprep.mubr.bf16.mxu0 0
      %1568 = vmatmul.mubr.bf16.gmra.mrb[0].mxu0 %v665
      %v1569 = vpop.f32.mrb[0].mxu0
      %v1570 = vadd.f32 0.0, %v1569
      %v1571 = vpop.f32.mrb[0].mxu0
      %v1572 = vpop.f32.mrb[0].mxu0
      %v1573 = vadd.f32 0.0, %v1572
      %v1574 = vpop.f32.mrb[0].mxu0
      %1575 = vmatprep.mubr.bf16.mxu0 0
      %1576 = vmatmul.mubr.bf16.gmra.mrb[0].mxu0 %v668
      %v1577 = vpop.f32.mrb[0].mxu0
      %v1578 = vadd.f32 0.0, %v1577
      %v1579 = vpop.f32.mrb[0].mxu0
      %v1580 = vpop.f32.mrb[0].mxu0
      %v1581 = vadd.f32 0.0, %v1580
      %v1582 = vpop.f32.mrb[0].mxu0
      %1583 = vmatprep.mubr.bf16.mxu0 0
      %1584 = vmatmul.mubr.bf16.gmra.mrb[0].mxu0 %v671
      %v1585 = vpop.f32.mrb[0].mxu0
      %v1586 = vadd.f32 0.0, %v1585
      %v1587 = vpop.f32.mrb[0].mxu0
      %v1588 = vpop.f32.mrb[0].mxu0
      %v1589 = vadd.f32 0.0, %v1588
      %v1590 = vpop.f32.mrb[0].mxu0
      %1591 = vdwg.mxu0
      %v1592 = vpack.c.bf16 %v1581, %v1578
      %v1593 = vpack.c.bf16 %v1589, %v1586
      %v1594 = vadd.f32 %v1546, %v758
      %v1595 = vadd.f32 %v1549, %v762
      %v1596 = vadd.f32 %v1554, %v766
      %v1597 = vadd.f32 %v1557, %v770
      %v1598 = vxor.u32 %v1594, 2147483648
      %v1599 = vxor.u32 %v1595, 2147483648
      %v1600 = vxor.u32 %v1596, 2147483648
      %v1601 = vxor.u32 %v1597, 2147483648
      %v1602 = vmul.f32 %v1598, 1.442695
      %v1603 = vpow.pop %v1602
      %v1604 = vmul.f32 %v1599, 1.442695
      %v1605 = vpow.pop %v1604
      %v1606 = vmul.f32 %v1600, 1.442695
      %v1607 = vpow.pop %v1606
      %v1608 = vmul.f32 %v1601, 1.442695
      %v1609 = vpow.pop %v1608
      %v1610 = vadd.f32 %v1603, 1.0
      %v1611 = vadd.f32 %v1605, 1.0
      %v1612 = vadd.f32 %v1607, 1.0
      %v1613 = vadd.f32 %v1609, 1.0
      %v1614 = vrcp.pop %v1610
      %v1615 = vmul.f32 1.0, %v1614
      %v1616 = vrcp.pop %v1611
      %v1617 = vmul.f32 1.0, %v1616
      %v1618 = vrcp.pop %v1612
      %v1619 = vmul.f32 1.0, %v1618
      %v1620 = vrcp.pop %v1613
      %v1621 = vmul.f32 1.0, %v1620
      %v1622 = vadd.f32 %v1562, %v802
      %v1623 = vadd.f32 %v1565, %v806
      %v1624 = vadd.f32 %v1570, %v810
      %v1625 = vadd.f32 %v1573, %v814
      %v1626 = vxor.u32 %v1622, 2147483648
      %v1627 = vxor.u32 %v1623, 2147483648
      %v1628 = vxor.u32 %v1624, 2147483648
      %v1629 = vxor.u32 %v1625, 2147483648
      %v1630 = vmul.f32 %v1626, 1.442695
      %v1631 = vpow.pop %v1630
      %v1632 = vmul.f32 %v1627, 1.442695
      %v1633 = vpow.pop %v1632
      %v1634 = vmul.f32 %v1628, 1.442695
      %v1635 = vpow.pop %v1634
      %v1636 = vmul.f32 %v1629, 1.442695
      %v1637 = vpow.pop %v1636
      %v1638 = vadd.f32 %v1631, 1.0
      %v1639 = vadd.f32 %v1633, 1.0
      %v1640 = vadd.f32 %v1635, 1.0
      %v1641 = vadd.f32 %v1637, 1.0
      %v1642 = vrcp.pop %v1638
      %v1643 = vmul.f32 1.0, %v1642
      %v1644 = vrcp.pop %v1639
      %v1645 = vmul.f32 1.0, %v1644
      %v1646 = vrcp.pop %v1640
      %v1647 = vmul.f32 1.0, %v1646
      %v1648 = vrcp.pop %v1641
      %v1649 = vmul.f32 1.0, %v1648
      %v1650 = vmul.f32 %v1615, %v1344
      %v1651 = vmul.f32 %v1617, %v1345
      %v1652 = vmul.f32 %v1619, %v1346
      %v1653 = vmul.f32 %v1621, %v1347
      %v1654 = vpack.c.bf16 %v1651, %v1650
      %v1655 = vpack.c.bf16 %v1653, %v1652
      %v1656 = vunpack.c.l.bf16 %v1592
      %v1657 = vunpack.c.h.bf16 %v1592
      %v1658 = vunpack.c.l.bf16 %v1593
      %v1659 = vunpack.c.h.bf16 %v1593
      %1660 = vmatprep.subr.bf16.mxu0 0
      %1661 = vmatpush1.bf16.msra.mxu0 %v1654
      %1662 = vmatprep.subr.bf16.mxu0 0
      %1663 = vmatpush1.bf16.msra.mxu0 %v1655
      %1664 = vmatprep.subr.bf16.mxu0 0
      %1665 = vmatpush1.bf16.msra.mxu0 0
      %1666 = vmatprep.subr.bf16.mxu0 0
      %1667 = vmatpush1.bf16.msra.mxu0 0
      %1668 = vmatprep.subr.bf16.mxu0 0
      %1669 = vmatpush1.bf16.msra.mxu0 0
      %1670 = vmatprep.subr.bf16.mxu0 0
      %1671 = vmatpush1.bf16.msra.mxu0 0
      %1672 = vmatprep.subr.bf16.mxu0 0
      %1673 = vmatpush1.bf16.msra.mxu0 0
      %1674 = vmatprep.subr.bf16.mxu0 0
      %1675 = vmatpush1.bf16.msra.mxu0 0
      %1676 = vmatprep.subr.bf16.mxu0 0
      %1677 = vmatpush1.bf16.msra.mxu0 0
      %1678 = vmatprep.subr.bf16.mxu0 0
      %1679 = vmatpush1.bf16.msra.mxu0 0
      %1680 = vmatprep.subr.bf16.mxu0 0
      %1681 = vmatpush1.bf16.msra.mxu0 0
      %1682 = vmatprep.subr.bf16.mxu0 0
      %1683 = vmatpush1.bf16.msra.mxu0 0
      %1684 = vmatprep.subr.bf16.mxu0 0
      %1685 = vmatpush1.bf16.msra.mxu0 0
      %1686 = vmatprep.subr.bf16.mxu0 0
      %1687 = vmatpush1.bf16.msra.mxu0 0
      %1688 = vmatprep.subr.bf16.mxu0 0
      %1689 = vmatpush1.bf16.msra.mxu0 0
      %1690 = vmatprep.subr.bf16.mxu0 0
      %1691 = vmatpush1.bf16.msra.mxu0 0
      %1692 = vmatprep.mubr.bf16.mxu0 0
      %1693 = vmatmul.mubr.bf16.gmra.mrb[0].mxu0 %v869
      %v1694 = vpop.f32.mrb[0].mxu0
      %v1695 = vadd.f32 %v1656, %v1694
      %v1696 = vpop.f32.mrb[0].mxu0
      %v1697 = vpop.f32.mrb[0].mxu0
      %v1698 = vadd.f32 %v1657, %v1697
      %v1699 = vpop.f32.mrb[0].mxu0
      %1700 = vmatprep.mubr.bf16.mxu0 0
      %1701 = vmatmul.mubr.bf16.gmra.mrb[0].mxu0 %v872
      %v1702 = vpop.f32.mrb[0].mxu0
      %v1703 = vadd.f32 %v1658, %v1702
      %v1704 = vpop.f32.mrb[0].mxu0
      %v1705 = vpop.f32.mrb[0].mxu0
      %v1706 = vadd.f32 %v1659, %v1705
      %v1707 = vpop.f32.mrb[0].mxu0
      %1708 = vdwg.mxu0
      %v1709 = vadd.f32 %v1695, %v925
      %v1710 = vadd.f32 %v1698, %v929
      %v1711 = vadd.f32 %v1703, %v933
      %v1712 = vadd.f32 %v1706, %v937
      %v1713 = vtanh.pop %v1709
      %v1714 = vtanh.pop %v1710
      %v1715 = vtanh.pop %v1711
      %v1716 = vtanh.pop %v1712
      %v1717 = vsub.f32 %v1344, %v1713
      %v1718 = vsub.f32 %v1345, %v1714
      %v1719 = vsub.f32 %v1346, %v1715
      %v1720 = vsub.f32 %v1347, %v1716
      %v1721 = vmul.f32 %v1643, %v1717
      %v1722 = vmul.f32 %v1645, %v1718
      %v1723 = vmul.f32 %v1647, %v1719
      %v1724 = vmul.f32 %v1649, %v1720
      %v1725 = vadd.f32 %v1713, %v1721
      %v1726 = vadd.f32 %v1714, %v1722
      %v1727 = vadd.f32 %v1715, %v1723
      %v1728 = vadd.f32 %v1716, %v1724
      %v1729 = vtanh.pop %v1725
      %v1730 = vtanh.pop %v1726
      %v1731 = vtanh.pop %v1727
      %v1732 = vtanh.pop %v1728
      %1733 = vst [vmem:[%s298] sm:$0xff] %v1729
      %1734 = vst [vmem:[%s298 + $0x8] sm:$0xff] %v1730
      %1735 = vst [vmem:[%s298 + $0x10] sm:$0xff] %v1731
      %1736 = vst [vmem:[%s298 + $0x18] sm:$0xff] %v1732
      %p1737 = scmp.lt.s32.totalorder %s18, 1
      %s1738 = scalar_select %p1737, %s18, 1
      %s1739 = smul.addr %s1738, 4
      %s1740 = smul.addr %s1739, 8
      %s1741 = scalar_lea.vmem %s7, %s1740
      // Predicated region
      $region49: #{gated_dvn_pallas.1} parent=47 // pred_check
        %p1742 = pneg %p193
      $region50: #{gated_dvn_pallas.1} parent=47 // pred_check_branch
        %1744 = sbr.rel (%p1742) target = $region52
      $region51: #{gated_dvn_pallas.1} parent=47 // pred_region
        _
      $region52: #{gated_dvn_pallas.1} parent=47 // pred_fallthru
        _
    $region48: #{gated_dvn_pallas.1} parent=5 // pred_fallthru
      _
    %p1745 = scmp.le.s32.totalorder 2, %s13
    // Predicated region
    $region53: #{gated_dvn_pallas.1} parent=5 // pred_check
      %p1746 = pneg %p1745
    $region54: #{gated_dvn_pallas.1} parent=5 // pred_check_branch
      %1748 = sbr.rel (%p1746) target = $region56
    $region55: #{gated_dvn_pallas.1} parent=5 // pred_region
      %s1749 = ssub.s32 %s13, 2
      // Predicated region
      $region57: #{gated_dvn_pallas.1} parent=55 // pred_check
        %p1750 = pneg %p199
      $region58: #{gated_dvn_pallas.1} parent=55 // pred_check_branch
        %1752 = sbr.rel (%p1750) target = $region60
      $region59: #{gated_dvn_pallas.1} parent=55 // pred_region
        %p1753 = scmp.lt.s32.totalorder %s19, 1
        %s1754 = scalar_select %p1753, %s19, 1
        %s1755 = smul.addr %s1754, 4
        %s1756 = smul.addr %s1755, 8
        %s1757 = scalar_lea.vmem %s7, %s1756
      $region60: #{gated_dvn_pallas.1} parent=55 // pred_fallthru
        _
    $region56: #{gated_dvn_pallas.1} parent=5 // pred_fallthru
      _
  $region6: #{gated_dvn_pallas.1} parent=0 // loop_footer
    %s17 = sadd.s32 1, %s13
  $region7: #{gated_dvn_pallas.1} parent=0 // loop_footer_branch
    %12 = sbr.rel target = $region3
  $region8: #{gated_dvn_pallas.1} parent=0 // loop_exit
    _

</llo_original>
